<compile_context>
chip_gen: v5e
topology: v5e:2x2
jax: 0.10.0
libtpu: 0.0.40
codegen_flags: <defaults>
</compile_context>

<pallas_src>
import functools

import jax
import jax.numpy as jnp
from jax.experimental import pallas as pl
from jax.experimental.pallas import tpu as pltpu


def _make_divisible(v, divisor=8, min_value=None, round_limit=0.9):
    # timm's make_divisible (used by SqueezeExcite to pick reduced channels)
    min_value = min_value or divisor
    new_v = max(min_value, int(v + divisor / 2) // divisor * divisor)
    if new_v < round_limit * v:
        new_v += divisor
    return new_v


# ----------------------------- in-kernel math -------------------------------

def _erf_f32(x):
    # Abramowitz & Stegun 7.1.26 rational approximation, |error| <= 1.5e-7
    # (i.e. exact at f32 precision).  Uses only exp / div / abs / where, all of
    # which have Mosaic lowerings (exp goes to the EUP slot).
    a1, a2, a3, a4, a5 = (0.254829592, -0.284496736, 1.421413741,
                          -1.453152027, 1.061405429)
    p = 0.3275911
    ax = jnp.abs(x)
    t = 1.0 / (1.0 + p * ax)
    poly = ((((a5 * t + a4) * t + a3) * t + a2) * t + a1) * t
    y = 1.0 - poly * jnp.exp(-ax * ax)
    return jnp.where(x >= 0.0, y, -y)


def _gelu_exact(x):
    # nn.GELU() (default, exact erf form): x * Phi(x)
    return 0.5 * x * (1.0 + _erf_f32(x * 0.7071067811865476))


# ----------------------------- Pallas kernel --------------------------------

def repvit_kernel(cols_ref, w3_ref, b3_ref,
                  sew1_ref, seb1_ref, sew2_ref, seb2_ref,
                  fw1_ref, fb1_ref, fw2_ref, fb2_ref,
                  o_ref, *, Bt, HW, C):
    # --- RepConv: one im2col matmul, K = 9*C, bf16 operands, f32 accumulate --
    t = jnp.dot(cols_ref[...], w3_ref[...],
                preferred_element_type=jnp.float32) + b3_ref[...]   # (rows, C)

    # --- SqueezeExcite(C, 0.25): per-sample avgpool -> 1x1 reduce -> ReLU
    #     -> 1x1 expand -> sigmoid -> channel gate (all f32) ------------------
    t3 = t.reshape(Bt, HW, C)                       # leading-dim split (free)
    pooled = jnp.mean(t3, axis=1)                   # (Bt, C), per-sample mean
    s = jnp.dot(pooled, sew1_ref[...],
                preferred_element_type=jnp.float32) + seb1_ref[...]
    s = jnp.maximum(s, 0.0)                         # ReLU
    g = jnp.dot(s, sew2_ref[...],
                preferred_element_type=jnp.float32) + seb2_ref[...]
    g = jax.nn.sigmoid(g)                           # (Bt, C)
    y = (t3 * g[:, None, :]).reshape(Bt * HW, C)    # gated, back to (rows, C)

    # --- FFN: 1x1 (C->2C) -> exact GELU -> 1x1 (2C->C) + residual ------------
    h = jnp.dot(y.astype(jnp.bfloat16), fw1_ref[...],
                preferred_element_type=jnp.float32) + fb1_ref[...]
    h = _gelu_exact(h)                               # nn.GELU() exact (erf)
    out = jnp.dot(h.astype(jnp.bfloat16), fw2_ref[...],
                  preferred_element_type=jnp.float32) + fb2_ref[...] + y

    o_ref[...] = out                                 # no in-kernel reshape


def repvit_forward(x_nchw, params):
    B, C, H, W = x_nchw.shape
    HW = H * W
    Crd = params["se_w1"].shape[1]

    # im2col in the wrapper: cols[b*HW + h*W + w, (kh*3+kw)*C + ci]
    #   = x_pad[b, ci, h+kh, w+kw]   (padding folded into the precompute)
    x = jnp.transpose(x_nchw, (0, 2, 3, 1))                   # NCHW -> NHWC
    xp = jnp.pad(x, ((0, 0), (1, 1), (1, 1), (0, 0)))
    taps = [xp[:, kh:kh + H, kw:kw + W, :]
            for kh in range(3) for kw in range(3)]
    cols = jnp.concatenate(taps, axis=-1).reshape(B * HW, 9 * C)
    cols = cols.astype(jnp.bfloat16)                          # halve DMA bytes

    # Fold Bt whole samples into one grid step so Bt*HW ~ 128 MXU rows.
    Bt = min(B, max(1, 128 // HW))
    while B % Bt:
        Bt -= 1
    rows = Bt * HW
    grid = (B // Bt,)   # at larger B this stays >= 2 -> both v7x TCs busy

    def full(shape):    # whole-array (2-D) block, replicated across the grid
        return pl.BlockSpec(shape, lambda b: (0, 0))

    kernel = functools.partial(repvit_kernel, Bt=Bt, HW=HW, C=C)
    out_flat = pl.pallas_call(
        kernel,
        out_shape=jax.ShapeDtypeStruct((B * HW, C), jnp.float32),
        grid=grid,
        in_specs=[
            pl.BlockSpec((rows, 9 * C), lambda b: (b, 0)),    # im2col activations
            full((9 * C, C)), full((1, C)),                   # RepConv w, b
            full((C, Crd)), full((1, Crd)),                   # SE reduce w, b
            full((Crd, C)), full((1, C)),                     # SE expand w, b
            full((C, 2 * C)), full((1, 2 * C)),               # FFN conv1 w, b
            full((2 * C, C)), full((1, C)),                   # FFN conv2 w, b
        ],
        out_specs=pl.BlockSpec((rows, C), lambda b: (b, 0)),
        compiler_params=pltpu.CompilerParams(
            dimension_semantics=("parallel",)),
    )(cols, params["w3"], params["b3"],
      params["se_w1"], params["se_b1"], params["se_w2"], params["se_b2"],
      params["ffn_w1"], params["ffn_b1"], params["ffn_w2"], params["ffn_b2"])

    # wrapper-side reshape/transpose back to NCHW (metadata only under jit)
    return jnp.transpose(out_flat.reshape(B, H, W, C), (0, 3, 1, 2))


# ----------------------- pure-JAX (PyTorch-semantics) reference --------------

def repvit_reference(x, tp):
    def conv(x, w, b, pad):
        y = jax.lax.conv_general_dilated(
            x, w, (1, 1), ((pad, pad), (pad, pad)),
            dimension_numbers=("NCHW", "OIHW", "NCHW"),
            precision=jax.lax.Precision.HIGHEST)      # true-f32 reference
        return y + b[None, :, None, None]

    t = conv(x, tp["w3"], tp["b3"], 1)                              # RepConv
    pooled = jnp.mean(t, axis=(2, 3), keepdims=True)                # SE
    s = jax.nn.relu(conv(pooled, tp["se_w1"], tp["se_b1"], 0))
    g = jax.nn.sigmoid(conv(s, tp["se_w2"], tp["se_b2"], 0))
    y = t * g
    h = jax.nn.gelu(conv(y, tp["ffn_w1"], tp["ffn_b1"], 0), approximate=False)
    return conv(h, tp["ffn_w2"], tp["ffn_b2"], 0) + y               # FFN + res


# --------------------------------- main --------------------------------------

if __name__ == "__main__":
    N = 32               # channels
    B, H, W = 2, 8, 8    # small shapes consistent with a Conv2d NCHW forward
    Crd = _make_divisible(N * 0.25, 8)   # SqueezeExcite reduced channels

    key = jax.random.PRNGKey(0)
    ks = jax.random.split(key, 12)

    # Deterministic synthetic parameters in PyTorch (OIHW) layout.
    torch_params = {
        "w3":     0.1 * jax.random.normal(ks[0], (N, N, 3, 3), jnp.float32),
        "b3":     0.1 * jax.random.normal(ks[1], (N,), jnp.float32),
        "se_w1":  0.1 * jax.random.normal(ks[2], (Crd, N, 1, 1), jnp.float32),
        "se_b1":  0.1 * jax.random.normal(ks[3], (Crd,), jnp.float32),
        "se_w2":  0.1 * jax.random.normal(ks[4], (N, Crd, 1, 1), jnp.float32),
        "se_b2":  0.1 * jax.random.normal(ks[5], (N,), jnp.float32),
        "ffn_w1": 0.1 * jax.random.normal(ks[6], (2 * N, N, 1, 1), jnp.float32),
        "ffn_b1": 0.1 * jax.random.normal(ks[7], (2 * N,), jnp.float32),
        "ffn_w2": 0.1 * jax.random.normal(ks[8], (N, 2 * N, 1, 1), jnp.float32),
        "ffn_b2": 0.1 * jax.random.normal(ks[9], (N,), jnp.float32),
    }

    # Repack for the kernel: matmul-friendly (Cin, Cout) layouts, biases (1, C).
    # MXU-facing weights are cast to bf16 once here (f32 accumulation in-kernel).
    kernel_params = {
        "w3":     jnp.transpose(torch_params["w3"], (2, 3, 1, 0))
                     .reshape(9 * N, N).astype(jnp.bfloat16),          # (9C, C)
        "b3":     torch_params["b3"].reshape(1, N),
        "se_w1":  torch_params["se_w1"][:, :, 0, 0].T,                 # (C, Crd) f32
        "se_b1":  torch_params["se_b1"].reshape(1, Crd),
        "se_w2":  torch_params["se_w2"][:, :, 0, 0].T,                 # (Crd, C) f32
        "se_b2":  torch_params["se_b2"].reshape(1, N),
        "ffn_w1": torch_params["ffn_w1"][:, :, 0, 0].T.astype(jnp.bfloat16),
        "ffn_b1": torch_params["ffn_b1"].reshape(1, 2 * N),
        "ffn_w2": torch_params["ffn_w2"][:, :, 0, 0].T.astype(jnp.bfloat16),
        "ffn_b2": torch_params["ffn_b2"].reshape(1, N),
    }

    x = jax.random.normal(ks[10], (B, N, H, W), jnp.float32)   # NCHW, like PyTorch

    out = jax.block_until_ready(jax.jit(repvit_forward)(x, kernel_params))
    ref = jax.block_until_ready(repvit_reference(x, torch_params))

    assert out.shape == (B, N, H, W)
    # bf16 MXU operands vs a Precision.HIGHEST f32 reference: tolerance
    # loosened from 1e-4 accordingly.
    assert jnp.allclose(out, ref, atol=3e-2, rtol=3e-2), (
        float(jnp.max(jnp.abs(out - ref))))

    print("KERNEL_OK")
</pallas_src>

<mosaic_0001>
module attributes {stable_mosaic.version = 11 : i64} {
  func.func @repvit_kernel(%arg0: i32, %arg1: memref<128x288xbf16, #tpu.memory_space<vmem>>, %arg2: memref<288x32xbf16, #tpu.memory_space<vmem>>, %arg3: memref<1x32xf32, #tpu.memory_space<vmem>>, %arg4: memref<32x8xf32, #tpu.memory_space<vmem>>, %arg5: memref<1x8xf32, #tpu.memory_space<vmem>>, %arg6: memref<8x32xf32, #tpu.memory_space<vmem>>, %arg7: memref<1x32xf32, #tpu.memory_space<vmem>>, %arg8: memref<32x64xbf16, #tpu.memory_space<vmem>>, %arg9: memref<1x64xf32, #tpu.memory_space<vmem>>, %arg10: memref<64x32xbf16, #tpu.memory_space<vmem>>, %arg11: memref<1x32xf32, #tpu.memory_space<vmem>>, %arg12: memref<128x32xf32, #tpu.memory_space<vmem>>) attributes {dimension_semantics = [#tpu.dimension_semantics<parallel>], iteration_bounds = array<i64: 1>, scalar_prefetch = 0 : i64, scratch_operands = 0 : i64, tpu.core_type = #tpu.core_type<tc>, window_params = [{transform_indices = @transform_0, window_bounds = array<i64: 128, 288>}, {pipeline_mode = #tpu.pipeline_mode<synchronous>, transform_indices = @transform_1, window_bounds = array<i64: 288, 32>}, {pipeline_mode = #tpu.pipeline_mode<synchronous>, transform_indices = @transform_2, window_bounds = array<i64: 1, 32>}, {pipeline_mode = #tpu.pipeline_mode<synchronous>, transform_indices = @transform_3, window_bounds = array<i64: 32, 8>}, {pipeline_mode = #tpu.pipeline_mode<synchronous>, transform_indices = @transform_4, window_bounds = array<i64: 1, 8>}, {pipeline_mode = #tpu.pipeline_mode<synchronous>, transform_indices = @transform_5, window_bounds = array<i64: 8, 32>}, {pipeline_mode = #tpu.pipeline_mode<synchronous>, transform_indices = @transform_6, window_bounds = array<i64: 1, 32>}, {pipeline_mode = #tpu.pipeline_mode<synchronous>, transform_indices = @transform_7, window_bounds = array<i64: 32, 64>}, {pipeline_mode = #tpu.pipeline_mode<synchronous>, transform_indices = @transform_8, window_bounds = array<i64: 1, 64>}, {pipeline_mode = #tpu.pipeline_mode<synchronous>, transform_indices = @transform_9, window_bounds = array<i64: 64, 32>}, {pipeline_mode = #tpu.pipeline_mode<synchronous>, transform_indices = @transform_10, window_bounds = array<i64: 1, 32>}, {transform_indices = @transform_11, window_bounds = array<i64: 128, 32>}]} {
    %c0 = arith.constant 0 : index
    %c0_0 = arith.constant 0 : index
    %0 = vector.load %arg1[%c0, %c0_0] : memref<128x288xbf16, #tpu.memory_space<vmem>>, vector<128x288xbf16>
    %c0_1 = arith.constant 0 : index
    %c0_2 = arith.constant 0 : index
    %1 = vector.load %arg2[%c0_1, %c0_2] : memref<288x32xbf16, #tpu.memory_space<vmem>>, vector<288x32xbf16>
    %cst = arith.constant dense<0.000000e+00> : vector<128x32xf32>
    %2 = tpu.matmul %0, %1, %cst {dimension_numbers = #tpu.dot_dimension_numbers<[1], [0], [0], [1], [0, 0, 1, 1], [], []>} : vector<128x288xbf16>, vector<288x32xbf16>, vector<128x32xf32> -> vector<128x32xf32>
    %c0_3 = arith.constant 0 : index
    %c0_4 = arith.constant 0 : index
    %3 = vector.load %arg3[%c0_3, %c0_4] : memref<1x32xf32, #tpu.memory_space<vmem>>, vector<1x32xf32>
    %4 = vector.broadcast %3 : vector<1x32xf32> to vector<128x32xf32>
    %5 = arith.addf %2, %4 : vector<128x32xf32>
    %6 = vector.shape_cast %5 : vector<128x32xf32> to vector<2x64x32xf32>
    %cst_5 = arith.constant dense<0.000000e+00> : vector<2x32xf32>
    %7 = vector.multi_reduction <add>, %6, %cst_5 [1] : vector<2x64x32xf32> to vector<2x32xf32>
    %cst_6 = arith.constant 6.400000e+01 : f32
    %8 = vector.broadcast %cst_6 : f32 to vector<2x32xf32>
    %9 = arith.divf %7, %8 : vector<2x32xf32>
    %c0_7 = arith.constant 0 : index
    %c0_8 = arith.constant 0 : index
    %10 = vector.load %arg4[%c0_7, %c0_8] : memref<32x8xf32, #tpu.memory_space<vmem>>, vector<32x8xf32>
    %cst_9 = arith.constant dense<0.000000e+00> : vector<2x8xf32>
    %11 = tpu.matmul %9, %10, %cst_9 {dimension_numbers = #tpu.dot_dimension_numbers<[1], [0], [0], [1], [0, 0, 1, 1], [], []>} : vector<2x32xf32>, vector<32x8xf32>, vector<2x8xf32> -> vector<2x8xf32>
    %c0_10 = arith.constant 0 : index
    %c0_11 = arith.constant 0 : index
    %12 = vector.load %arg5[%c0_10, %c0_11] : memref<1x8xf32, #tpu.memory_space<vmem>>, vector<1x8xf32>
    %13 = vector.broadcast %12 : vector<1x8xf32> to vector<2x8xf32>
    %14 = arith.addf %11, %13 : vector<2x8xf32>
    %cst_12 = arith.constant 0.000000e+00 : f32
    %15 = vector.broadcast %cst_12 : f32 to vector<2x8xf32>
    %16 = arith.maximumf %14, %15 : vector<2x8xf32>
    %c0_13 = arith.constant 0 : index
    %c0_14 = arith.constant 0 : index
    %17 = vector.load %arg6[%c0_13, %c0_14] : memref<8x32xf32, #tpu.memory_space<vmem>>, vector<8x32xf32>
    %cst_15 = arith.constant dense<0.000000e+00> : vector<2x32xf32>
    %18 = tpu.matmul %16, %17, %cst_15 {dimension_numbers = #tpu.dot_dimension_numbers<[1], [0], [0], [1], [0, 0, 1, 1], [], []>} : vector<2x8xf32>, vector<8x32xf32>, vector<2x32xf32> -> vector<2x32xf32>
    %c0_16 = arith.constant 0 : index
    %c0_17 = arith.constant 0 : index
    %19 = vector.load %arg7[%c0_16, %c0_17] : memref<1x32xf32, #tpu.memory_space<vmem>>, vector<1x32xf32>
    %20 = vector.broadcast %19 : vector<1x32xf32> to vector<2x32xf32>
    %21 = arith.addf %18, %20 : vector<2x32xf32>
    %22 = arith.negf %21 : vector<2x32xf32>
    %23 = math.exp %22 : vector<2x32xf32>
    %cst_18 = arith.constant 1.000000e+00 : f32
    %24 = vector.broadcast %cst_18 : f32 to vector<2x32xf32>
    %25 = arith.addf %24, %23 : vector<2x32xf32>
    %26 = arith.divf %24, %25 : vector<2x32xf32>
    %27 = vector.shape_cast %26 : vector<2x32xf32> to vector<2x1x32xf32>
    %28 = vector.broadcast %27 : vector<2x1x32xf32> to vector<2x64x32xf32>
    %29 = arith.mulf %6, %28 : vector<2x64x32xf32>
    %30 = vector.shape_cast %29 : vector<2x64x32xf32> to vector<128x32xf32>
    %31 = arith.truncf %30 : vector<128x32xf32> to vector<128x32xbf16>
    %c0_19 = arith.constant 0 : index
    %c0_20 = arith.constant 0 : index
    %32 = vector.load %arg8[%c0_19, %c0_20] : memref<32x64xbf16, #tpu.memory_space<vmem>>, vector<32x64xbf16>
    %cst_21 = arith.constant dense<0.000000e+00> : vector<128x64xf32>
    %33 = tpu.matmul %31, %32, %cst_21 {dimension_numbers = #tpu.dot_dimension_numbers<[1], [0], [0], [1], [0, 0, 1, 1], [], []>} : vector<128x32xbf16>, vector<32x64xbf16>, vector<128x64xf32> -> vector<128x64xf32>
    %c0_22 = arith.constant 0 : index
    %c0_23 = arith.constant 0 : index
    %34 = vector.load %arg9[%c0_22, %c0_23] : memref<1x64xf32, #tpu.memory_space<vmem>>, vector<1x64xf32>
    %35 = vector.broadcast %34 : vector<1x64xf32> to vector<128x64xf32>
    %36 = arith.addf %33, %35 : vector<128x64xf32>
    %cst_24 = arith.constant 5.000000e-01 : f32
    %37 = vector.broadcast %cst_24 : f32 to vector<128x64xf32>
    %38 = arith.mulf %37, %36 : vector<128x64xf32>
    %cst_25 = arith.constant 0.707106769 : f32
    %39 = vector.broadcast %cst_25 : f32 to vector<128x64xf32>
    %40 = arith.mulf %36, %39 : vector<128x64xf32>
    %41 = math.absf %40 : vector<128x64xf32>
    %cst_26 = arith.constant 0.327591091 : f32
    %42 = vector.broadcast %cst_26 : f32 to vector<128x64xf32>
    %43 = arith.mulf %42, %41 : vector<128x64xf32>
    %cst_27 = arith.constant 1.000000e+00 : f32
    %44 = vector.broadcast %cst_27 : f32 to vector<128x64xf32>
    %45 = arith.addf %44, %43 : vector<128x64xf32>
    %cst_28 = arith.constant 1.000000e+00 : f32
    %46 = vector.broadcast %cst_28 : f32 to vector<128x64xf32>
    %47 = arith.divf %46, %45 : vector<128x64xf32>
    %cst_29 = arith.constant 1.06140542 : f32
    %48 = vector.broadcast %cst_29 : f32 to vector<128x64xf32>
    %49 = arith.mulf %48, %47 : vector<128x64xf32>
    %cst_30 = arith.constant -1.45315206 : f32
    %50 = vector.broadcast %cst_30 : f32 to vector<128x64xf32>
    %51 = arith.addf %49, %50 : vector<128x64xf32>
    %52 = arith.mulf %51, %47 : vector<128x64xf32>
    %cst_31 = arith.constant 1.42141378 : f32
    %53 = vector.broadcast %cst_31 : f32 to vector<128x64xf32>
    %54 = arith.addf %52, %53 : vector<128x64xf32>
    %55 = arith.mulf %54, %47 : vector<128x64xf32>
    %cst_32 = arith.constant -0.284496725 : f32
    %56 = vector.broadcast %cst_32 : f32 to vector<128x64xf32>
    %57 = arith.addf %55, %56 : vector<128x64xf32>
    %58 = arith.mulf %57, %47 : vector<128x64xf32>
    %cst_33 = arith.constant 0.254829586 : f32
    %59 = vector.broadcast %cst_33 : f32 to vector<128x64xf32>
    %60 = arith.addf %58, %59 : vector<128x64xf32>
    %61 = arith.mulf %60, %47 : vector<128x64xf32>
    %cst_34 = arith.constant 0.000000e+00 : f32
    %62 = vector.broadcast %cst_34 : f32 to vector<128x64xf32>
    %63 = arith.subf %62, %41 : vector<128x64xf32>
    %64 = arith.mulf %63, %41 : vector<128x64xf32>
    %65 = math.exp %64 : vector<128x64xf32>
    %66 = arith.mulf %61, %65 : vector<128x64xf32>
    %cst_35 = arith.constant 1.000000e+00 : f32
    %67 = vector.broadcast %cst_35 : f32 to vector<128x64xf32>
    %68 = arith.subf %67, %66 : vector<128x64xf32>
    %cst_36 = arith.constant 0.000000e+00 : f32
    %69 = vector.broadcast %cst_36 : f32 to vector<128x64xf32>
    %70 = arith.cmpf oge, %40, %69 : vector<128x64xf32>
    %cst_37 = arith.constant 0.000000e+00 : f32
    %71 = vector.broadcast %cst_37 : f32 to vector<128x64xf32>
    %72 = arith.subf %71, %68 : vector<128x64xf32>
    %73 = arith.select %70, %68, %72 : vector<128x64xi1>, vector<128x64xf32>
    %cst_38 = arith.constant 1.000000e+00 : f32
    %74 = vector.broadcast %cst_38 : f32 to vector<128x64xf32>
    %75 = arith.addf %74, %73 : vector<128x64xf32>
    %76 = arith.mulf %38, %75 : vector<128x64xf32>
    %77 = arith.truncf %76 : vector<128x64xf32> to vector<128x64xbf16>
    %c0_39 = arith.constant 0 : index
    %c0_40 = arith.constant 0 : index
    %78 = vector.load %arg10[%c0_39, %c0_40] : memref<64x32xbf16, #tpu.memory_space<vmem>>, vector<64x32xbf16>
    %cst_41 = arith.constant dense<0.000000e+00> : vector<128x32xf32>
    %79 = tpu.matmul %77, %78, %cst_41 {dimension_numbers = #tpu.dot_dimension_numbers<[1], [0], [0], [1], [0, 0, 1, 1], [], []>} : vector<128x64xbf16>, vector<64x32xbf16>, vector<128x32xf32> -> vector<128x32xf32>
    %c0_42 = arith.constant 0 : index
    %c0_43 = arith.constant 0 : index
    %80 = vector.load %arg11[%c0_42, %c0_43] : memref<1x32xf32, #tpu.memory_space<vmem>>, vector<1x32xf32>
    %81 = vector.broadcast %80 : vector<1x32xf32> to vector<128x32xf32>
    %82 = arith.addf %79, %81 : vector<128x32xf32>
    %83 = arith.addf %82, %30 : vector<128x32xf32>
    %c0_44 = arith.constant 0 : index
    %c0_45 = arith.constant 0 : index
    %84 = vector.load %arg12[%c0_44, %c0_45] : memref<128x32xf32, #tpu.memory_space<vmem>>, vector<128x32xf32>
    tpu.vector_store %arg12[%c0_44, %c0_45], %83 {strides = array<i32>} : memref<128x32xf32, #tpu.memory_space<vmem>>, vector<128x32xf32>,
    return
  }
  func.func @transform_0(%arg0: i32) -> (i32, i32) {
    %c0_i32 = arith.constant 0 : i32
    %c0_i32_0 = arith.constant 0 : i32
    return %arg0, %c0_i32 : i32, i32
  }
  func.func @transform_1(%arg0: i32) -> (i32, i32) {
    %c0_i32 = arith.constant 0 : i32
    %c0_i32_0 = arith.constant 0 : i32
    %c0_i32_1 = arith.constant 0 : i32
    return %c0_i32, %c0_i32_0 : i32, i32
  }
  func.func @transform_2(%arg0: i32) -> (i32, i32) {
    %c0_i32 = arith.constant 0 : i32
    %c0_i32_0 = arith.constant 0 : i32
    %c0_i32_1 = arith.constant 0 : i32
    return %c0_i32, %c0_i32_0 : i32, i32
  }
  func.func @transform_3(%arg0: i32) -> (i32, i32) {
    %c0_i32 = arith.constant 0 : i32
    %c0_i32_0 = arith.constant 0 : i32
    %c0_i32_1 = arith.constant 0 : i32
    return %c0_i32, %c0_i32_0 : i32, i32
  }
  func.func @transform_4(%arg0: i32) -> (i32, i32) {
    %c0_i32 = arith.constant 0 : i32
    %c0_i32_0 = arith.constant 0 : i32
    %c0_i32_1 = arith.constant 0 : i32
    return %c0_i32, %c0_i32_0 : i32, i32
  }
  func.func @transform_5(%arg0: i32) -> (i32, i32) {
    %c0_i32 = arith.constant 0 : i32
    %c0_i32_0 = arith.constant 0 : i32
    %c0_i32_1 = arith.constant 0 : i32
    return %c0_i32, %c0_i32_0 : i32, i32
  }
  func.func @transform_6(%arg0: i32) -> (i32, i32) {
    %c0_i32 = arith.constant 0 : i32
    %c0_i32_0 = arith.constant 0 : i32
    %c0_i32_1 = arith.constant 0 : i32
    return %c0_i32, %c0_i32_0 : i32, i32
  }
  func.func @transform_7(%arg0: i32) -> (i32, i32) {
    %c0_i32 = arith.constant 0 : i32
    %c0_i32_0 = arith.constant 0 : i32
    %c0_i32_1 = arith.constant 0 : i32
    return %c0_i32, %c0_i32_0 : i32, i32
  }
  func.func @transform_8(%arg0: i32) -> (i32, i32) {
    %c0_i32 = arith.constant 0 : i32
    %c0_i32_0 = arith.constant 0 : i32
    %c0_i32_1 = arith.constant 0 : i32
    return %c0_i32, %c0_i32_0 : i32, i32
  }
  func.func @transform_9(%arg0: i32) -> (i32, i32) {
    %c0_i32 = arith.constant 0 : i32
    %c0_i32_0 = arith.constant 0 : i32
    %c0_i32_1 = arith.constant 0 : i32
    return %c0_i32, %c0_i32_0 : i32, i32
  }
  func.func @transform_10(%arg0: i32) -> (i32, i32) {
    %c0_i32 = arith.constant 0 : i32
    %c0_i32_0 = arith.constant 0 : i32
    %c0_i32_1 = arith.constant 0 : i32
    return %c0_i32, %c0_i32_0 : i32, i32
  }
  func.func @transform_11(%arg0: i32) -> (i32, i32) {
    %c0_i32 = arith.constant 0 : i32
    %c0_i32_0 = arith.constant 0 : i32
    return %arg0, %c0_i32 : i32, i32
  }
}

</mosaic_0001>

<llo_original>
// kernel: repvit_forward.1
$region0: #{repvit_forward.1}
  #allocation0 [shape = 'u32[]', space=smem, size = 0x4, offset = 0x4, fixed_abs, tag = 'smem constant byte address 0x4 - core index']
  #allocation1 [shape = 'u32[72,128]{1,0:T(1,128)}', space=vmem, size = 0x9000, scoped, tag = 'internal scratch']
  %s0 = inlined_call_operand.vmem [shape: bf16[128,288], index: 0, kind: input, shape index: {}]
  %s1 = inlined_call_operand.vmem [shape: bf16[288,32], index: 1, kind: input, shape index: {}]
  %s2 = inlined_call_operand.vmem [shape: f32[1,32], index: 2, kind: input, shape index: {}]
  %s3 = inlined_call_operand.vmem [shape: f32[32,8], index: 3, kind: input, shape index: {}]
  %s4 = inlined_call_operand.vmem [shape: f32[1,8], index: 4, kind: input, shape index: {}]
  %s5 = inlined_call_operand.vmem [shape: f32[8,32], index: 5, kind: input, shape index: {}]
  %s6 = inlined_call_operand.vmem [shape: f32[1,32], index: 6, kind: input, shape index: {}]
  %s7 = inlined_call_operand.vmem [shape: bf16[32,64], index: 7, kind: input, shape index: {}]
  %s8 = inlined_call_operand.vmem [shape: f32[1,64], index: 8, kind: input, shape index: {}]
  %s9 = inlined_call_operand.vmem [shape: bf16[64,32], index: 9, kind: input, shape index: {}]
  %s10 = inlined_call_operand.vmem [shape: f32[1,32], index: 10, kind: input, shape index: {}]
  %s11 = inlined_call_operand.hbm [shape: f32[128,32], index: 11, kind: output, shape index: {}]
  %s12 = sld [smem:[#allocation0]]
  $region54: #{repvit_forward.1} parent=0
    _
  %s14 = ssub.s32 1, %s12
  %s15 = scalar_select 0, %s14, %s12
  $region1: #{repvit_forward.1} parent=0
    #allocation2 [shape = 'u8[65536]{0}', space=vmem, size = 0x10000, scoped, tag = 'output window, operand 0, single buffered']
    #allocation3 [shape = 's32[1]{0}', space=sflag, size = 0x4, scoped, tag = 'scoped memory for repvit_forward.1']
    %16 = vsyncpa [#allocation3], 0
    // Predicated region
    $region2: #{repvit_forward.1} parent=1 // pred_check
      _
    $region3: #{repvit_forward.1} parent=1 // pred_check_branch
      %18 = sbr.rel (0) target = $region5
    $region4: #{repvit_forward.1} parent=1 // pred_region
      _
    $region5: #{repvit_forward.1} parent=1 // pred_fallthru
      _
    // Predicated region
    $region6: #{repvit_forward.1} parent=1 // pred_check
      _
    $region7: #{repvit_forward.1} parent=1 // pred_check_branch
      %20 = sbr.rel (0) target = $region9
    $region8: #{repvit_forward.1} parent=1 // pred_region
      _
    $region9: #{repvit_forward.1} parent=1 // pred_fallthru
      _
    // Predicated region
    $region10: #{repvit_forward.1} parent=1 // pred_check
      _
    $region11: #{repvit_forward.1} parent=1 // pred_check_branch
      %22 = sbr.rel (0) target = $region13
    $region12: #{repvit_forward.1} parent=1 // pred_region
      _
    $region13: #{repvit_forward.1} parent=1 // pred_fallthru
      _
    // Predicated region
    $region14: #{repvit_forward.1} parent=1 // pred_check
      _
    $region15: #{repvit_forward.1} parent=1 // pred_check_branch
      %24 = sbr.rel (0) target = $region17
    $region16: #{repvit_forward.1} parent=1 // pred_region
      _
    $region17: #{repvit_forward.1} parent=1 // pred_fallthru
      _
    // Predicated region
    $region18: #{repvit_forward.1} parent=1 // pred_check
      _
    $region19: #{repvit_forward.1} parent=1 // pred_check_branch
      %26 = sbr.rel (0) target = $region21
    $region20: #{repvit_forward.1} parent=1 // pred_region
      _
    $region21: #{repvit_forward.1} parent=1 // pred_fallthru
      _
    // Predicated region
    $region22: #{repvit_forward.1} parent=1 // pred_check
      _
    $region23: #{repvit_forward.1} parent=1 // pred_check_branch
      %28 = sbr.rel (0) target = $region25
    $region24: #{repvit_forward.1} parent=1 // pred_region
      _
    $region25: #{repvit_forward.1} parent=1 // pred_fallthru
      _
    // Predicated region
    $region26: #{repvit_forward.1} parent=1 // pred_check
      _
    $region27: #{repvit_forward.1} parent=1 // pred_check_branch
      %30 = sbr.rel (0) target = $region29
    $region28: #{repvit_forward.1} parent=1 // pred_region
      _
    $region29: #{repvit_forward.1} parent=1 // pred_fallthru
      _
    // Predicated region
    $region30: #{repvit_forward.1} parent=1 // pred_check
      _
    $region31: #{repvit_forward.1} parent=1 // pred_check_branch
      %32 = sbr.rel (0) target = $region33
    $region32: #{repvit_forward.1} parent=1 // pred_region
      _
    $region33: #{repvit_forward.1} parent=1 // pred_fallthru
      _
    // Predicated region
    $region34: #{repvit_forward.1} parent=1 // pred_check
      _
    $region35: #{repvit_forward.1} parent=1 // pred_check_branch
      %34 = sbr.rel (0) target = $region37
    $region36: #{repvit_forward.1} parent=1 // pred_region
      _
    $region37: #{repvit_forward.1} parent=1 // pred_fallthru
      _
    // Predicated region
    $region38: #{repvit_forward.1} parent=1 // pred_check
      _
    $region39: #{repvit_forward.1} parent=1 // pred_check_branch
      %36 = sbr.rel (0) target = $region41
    $region40: #{repvit_forward.1} parent=1 // pred_region
      _
    $region41: #{repvit_forward.1} parent=1 // pred_fallthru
      _
    // Predicated region
    $region42: #{repvit_forward.1} parent=1 // pred_check
      _
    $region43: #{repvit_forward.1} parent=1 // pred_check_branch
      %38 = sbr.rel (0) target = $region45
    $region44: #{repvit_forward.1} parent=1 // pred_region
      _
    $region45: #{repvit_forward.1} parent=1 // pred_fallthru
      _
    %v40 = vld [vmem:[%s0] sm:$0xff]
    %v41 = vld [vmem:[%s0 + $0x8] sm:$0xf]
    %v42 = vld [vmem:[%s0 + $0xc] sm:$0xff]
    %v43 = vld [vmem:[%s0 + $0x14] sm:$0xf]
    %v44 = vld [vmem:[%s0 + $0x18] sm:$0xff]
    %v45 = vld [vmem:[%s0 + $0x20] sm:$0xf]
    %v46 = vld [vmem:[%s0 + $0x24] sm:$0xff]
    %v47 = vld [vmem:[%s0 + $0x2c] sm:$0xf]
    %v48 = vld [vmem:[%s0 + $0x30] sm:$0xff]
    %v49 = vld [vmem:[%s0 + $0x38] sm:$0xf]
    %v50 = vld [vmem:[%s0 + $0x3c] sm:$0xff]
    %v51 = vld [vmem:[%s0 + $0x44] sm:$0xf]
    %v52 = vld [vmem:[%s0 + $0x48] sm:$0xff]
    %v53 = vld [vmem:[%s0 + $0x50] sm:$0xf]
    %v54 = vld [vmem:[%s0 + $0x54] sm:$0xff]
    %v55 = vld [vmem:[%s0 + $0x5c] sm:$0xf]
    %v56 = vld [vmem:[%s0 + $0x60] sm:$0xff]
    %v57 = vld [vmem:[%s0 + $0x68] sm:$0xf]
    %v58 = vld [vmem:[%s0 + $0x6c] sm:$0xff]
    %v59 = vld [vmem:[%s0 + $0x74] sm:$0xf]
    %v60 = vld [vmem:[%s0 + $0x78] sm:$0xff]
    %v61 = vld [vmem:[%s0 + $0x80] sm:$0xf]
    %v62 = vld [vmem:[%s0 + $0x84] sm:$0xff]
    %v63 = vld [vmem:[%s0 + $0x8c] sm:$0xf]
    %v64 = vld [vmem:[%s0 + $0x90] sm:$0xff]
    %v65 = vld [vmem:[%s0 + $0x98] sm:$0xf]
    %v66 = vld [vmem:[%s0 + $0x9c] sm:$0xff]
    %v67 = vld [vmem:[%s0 + $0xa4] sm:$0xf]
    %v68 = vld [vmem:[%s0 + $0xa8] sm:$0xff]
    %v69 = vld [vmem:[%s0 + $0xb0] sm:$0xf]
    %v70 = vld [vmem:[%s0 + $0xb4] sm:$0xff]
    %v71 = vld [vmem:[%s0 + $0xbc] sm:$0xf]
    %v72 = vld [vmem:[%s1] sm:$0xf]
    %v73 = vld [vmem:[%s1 + $0x4] sm:$0xf]
    %v74 = vld [vmem:[%s1 + $0x8] sm:$0xf]
    %v75 = vld [vmem:[%s1 + $0xc] sm:$0xf]
    %v76 = vld [vmem:[%s1 + $0x10] sm:$0xf]
    %v77 = vld [vmem:[%s1 + $0x14] sm:$0xf]
    %v78 = vld [vmem:[%s1 + $0x18] sm:$0xf]
    %v79 = vld [vmem:[%s1 + $0x1c] sm:$0xf]
    %v80 = vld [vmem:[%s1 + $0x20] sm:$0xf]
    %v81 = vld [vmem:[%s1 + $0x24] sm:$0xf]
    %v82 = vld [vmem:[%s1 + $0x28] sm:$0xf]
    %v83 = vld [vmem:[%s1 + $0x2c] sm:$0xf]
    %v84 = vld [vmem:[%s1 + $0x30] sm:$0xf]
    %v85 = vld [vmem:[%s1 + $0x34] sm:$0xf]
    %v86 = vld [vmem:[%s1 + $0x38] sm:$0xf]
    %v87 = vld [vmem:[%s1 + $0x3c] sm:$0xf]
    %v88 = vld [vmem:[%s1 + $0x40] sm:$0xf]
    %v89 = vld [vmem:[%s1 + $0x44] sm:$0xf]
    %v90 = vld [vmem:[%s1 + $0x48] sm:$0xf]
    %v91 = vld [vmem:[%s1 + $0x4c] sm:$0xf]
    %v92 = vld [vmem:[%s1 + $0x50] sm:$0xf]
    %v93 = vld [vmem:[%s1 + $0x54] sm:$0xf]
    %v94 = vld [vmem:[%s1 + $0x58] sm:$0xf]
    %v95 = vld [vmem:[%s1 + $0x5c] sm:$0xf]
    %v96 = vld [vmem:[%s1 + $0x60] sm:$0xf]
    %v97 = vld [vmem:[%s1 + $0x64] sm:$0xf]
    %v98 = vld [vmem:[%s1 + $0x68] sm:$0xf]
    %v99 = vld [vmem:[%s1 + $0x6c] sm:$0xf]
    %v100 = vld [vmem:[%s1 + $0x70] sm:$0xf]
    %v101 = vld [vmem:[%s1 + $0x74] sm:$0xf]
    %v102 = vld [vmem:[%s1 + $0x78] sm:$0xf]
    %v103 = vld [vmem:[%s1 + $0x7c] sm:$0xf]
    %v104 = vld [vmem:[%s1 + $0x80] sm:$0xf]
    %v105 = vld [vmem:[%s1 + $0x84] sm:$0xf]
    %v106 = vld [vmem:[%s1 + $0x88] sm:$0xf]
    %v107 = vld [vmem:[%s1 + $0x8c] sm:$0xf]
    %v108 = vld [vmem:[%s2] sm:$0x1]
    %v110 = vperm.slane %v108, 0
    %v144 = vunpack.c.l.b16 %v40
    %v145 = vunpack.c.h.b16 %v40
    %v146 = vunpack.c.l.b16 %v41
    %v147 = vunpack.c.l.b16 %v42
    %v148 = vunpack.c.h.b16 %v42
    %v149 = vunpack.c.l.b16 %v43
    %v150 = vunpack.c.l.b16 %v44
    %v151 = vunpack.c.h.b16 %v44
    %v152 = vunpack.c.l.b16 %v45
    %v153 = vunpack.c.l.b16 %v46
    %v154 = vunpack.c.h.b16 %v46
    %v155 = vunpack.c.l.b16 %v47
    %v156 = vunpack.c.l.b16 %v48
    %v157 = vunpack.c.h.b16 %v48
    %v158 = vunpack.c.l.b16 %v49
    %v159 = vunpack.c.l.b16 %v50
    %v160 = vunpack.c.h.b16 %v50
    %v161 = vunpack.c.l.b16 %v51
    %v162 = vunpack.c.l.b16 %v52
    %v163 = vunpack.c.h.b16 %v52
    %v164 = vunpack.c.l.b16 %v53
    %v165 = vunpack.c.l.b16 %v54
    %v166 = vunpack.c.h.b16 %v54
    %v167 = vunpack.c.l.b16 %v55
    %v168 = vunpack.c.l.b16 %v56
    %v169 = vunpack.c.h.b16 %v56
    %v170 = vunpack.c.l.b16 %v57
    %v171 = vunpack.c.l.b16 %v58
    %v172 = vunpack.c.h.b16 %v58
    %v173 = vunpack.c.l.b16 %v59
    %v174 = vunpack.c.l.b16 %v60
    %v175 = vunpack.c.h.b16 %v60
    %v176 = vunpack.c.l.b16 %v61
    %v177 = vunpack.c.l.b16 %v62
    %v178 = vunpack.c.h.b16 %v62
    %v179 = vunpack.c.l.b16 %v63
    %v180 = vunpack.c.l.b16 %v64
    %v181 = vunpack.c.h.b16 %v64
    %v182 = vunpack.c.l.b16 %v65
    %v183 = vunpack.c.l.b16 %v66
    %v184 = vunpack.c.h.b16 %v66
    %v185 = vunpack.c.l.b16 %v67
    %v186 = vunpack.c.l.b16 %v68
    %v187 = vunpack.c.h.b16 %v68
    %v188 = vunpack.c.l.b16 %v69
    %v189 = vunpack.c.l.b16 %v70
    %v190 = vunpack.c.h.b16 %v70
    %v191 = vunpack.c.l.b16 %v71
    %v192 = vpack.c.b16 %v147, %v144
    %v193 = vpack.c.b16 %v148, %v145
    %v194 = vpack.c.b16 %v149, %v146
    %v195 = vpack.c.b16 %v153, %v150
    %v196 = vpack.c.b16 %v154, %v151
    %v197 = vpack.c.b16 %v155, %v152
    %v198 = vpack.c.b16 %v159, %v156
    %v199 = vpack.c.b16 %v160, %v157
    %v200 = vpack.c.b16 %v161, %v158
    %v201 = vpack.c.b16 %v165, %v162
    %v202 = vpack.c.b16 %v166, %v163
    %v203 = vpack.c.b16 %v167, %v164
    %v204 = vpack.c.b16 %v171, %v168
    %v205 = vpack.c.b16 %v172, %v169
    %v206 = vpack.c.b16 %v173, %v170
    %v207 = vpack.c.b16 %v177, %v174
    %v208 = vpack.c.b16 %v178, %v175
    %v209 = vpack.c.b16 %v179, %v176
    %v210 = vpack.c.b16 %v183, %v180
    %v211 = vpack.c.b16 %v184, %v181
    %v212 = vpack.c.b16 %v185, %v182
    %v213 = vpack.c.b16 %v189, %v186
    %v214 = vpack.c.b16 %v190, %v187
    %v215 = vpack.c.b16 %v191, %v188
    %v268 = vunpack.c.l.b16 %v72
    %v269 = vunpack.c.l.b16 %v73
    %v270 = vunpack.c.l.b16 %v74
    %v271 = vunpack.c.l.b16 %v75
    %v272 = vunpack.c.l.b16 %v76
    %v273 = vunpack.c.l.b16 %v77
    %v274 = vunpack.c.l.b16 %v78
    %v275 = vunpack.c.l.b16 %v79
    %v276 = vunpack.c.l.b16 %v80
    %v277 = vunpack.c.l.b16 %v81
    %v278 = vunpack.c.l.b16 %v82
    %v279 = vunpack.c.l.b16 %v83
    %v280 = vunpack.c.l.b16 %v84
    %v281 = vunpack.c.l.b16 %v85
    %v282 = vunpack.c.l.b16 %v86
    %v283 = vunpack.c.l.b16 %v87
    %v284 = vunpack.c.l.b16 %v88
    %v285 = vunpack.c.l.b16 %v89
    %v286 = vunpack.c.l.b16 %v90
    %v287 = vunpack.c.l.b16 %v91
    %v288 = vunpack.c.l.b16 %v92
    %v289 = vunpack.c.l.b16 %v93
    %v290 = vunpack.c.l.b16 %v94
    %v291 = vunpack.c.l.b16 %v95
    %v292 = vunpack.c.l.b16 %v96
    %v293 = vunpack.c.l.b16 %v97
    %v294 = vunpack.c.l.b16 %v98
    %v295 = vunpack.c.l.b16 %v99
    %v296 = vunpack.c.l.b16 %v100
    %v297 = vunpack.c.l.b16 %v101
    %v298 = vunpack.c.l.b16 %v102
    %v299 = vunpack.c.l.b16 %v103
    %v300 = vunpack.c.l.b16 %v104
    %v301 = vunpack.c.l.b16 %v105
    %v302 = vunpack.c.l.b16 %v106
    %v303 = vunpack.c.l.b16 %v107
    %v304 = vpack.c.b16 %v269, %v268
    %v305 = vpack.c.b16 %v271, %v270
    %v306 = vpack.c.b16 %v273, %v272
    %v307 = vpack.c.b16 %v275, %v274
    %v308 = vpack.c.b16 %v277, %v276
    %v309 = vpack.c.b16 %v279, %v278
    %v310 = vpack.c.b16 %v281, %v280
    %v311 = vpack.c.b16 %v283, %v282
    %v312 = vpack.c.b16 %v285, %v284
    %v313 = vpack.c.b16 %v287, %v286
    %v314 = vpack.c.b16 %v289, %v288
    %v315 = vpack.c.b16 %v291, %v290
    %v316 = vpack.c.b16 %v293, %v292
    %v317 = vpack.c.b16 %v295, %v294
    %v318 = vpack.c.b16 %v297, %v296
    %v319 = vpack.c.b16 %v299, %v298
    %v320 = vpack.c.b16 %v301, %v300
    %v321 = vpack.c.b16 %v303, %v302
    %vm340 = vcmask 261120
    %v342 = vsel %vm340, %v194, 0
    %v345 = vsel %vm340, %v197, 0
    %v348 = vsel %vm340, %v200, 0
    %v351 = vsel %vm340, %v203, 0
    %v354 = vsel %vm340, %v206, 0
    %v357 = vsel %vm340, %v209, 0
    %v360 = vsel %vm340, %v212, 0
    %v363 = vsel %vm340, %v215, 0
    %365 = vmatpush.bf16.msra.mxu0 %v311
    %366 = vmatpush.bf16.msra.mxu0 %v310
    %367 = vmatpush.bf16.msra.mxu0 %v309
    %368 = vmatpush.bf16.msra.mxu0 %v308
    %369 = vmatpush.bf16.msra.mxu0 %v307
    %370 = vmatpush.bf16.msra.mxu0 %v306
    %371 = vmatpush.bf16.msra.mxu0 %v305
    %372 = vmatpush.bf16.msra.mxu0 %v304
    %373 = vmatmul.bf16.gmra.mxu0 %v192
    %v374 = vpop.f32.mrf.mxu0
    %v375 = vadd.f32 %v110, %v374
    %v376 = vpop.f32.mrf.mxu0
    %v377 = vadd.f32 %v110, %v376
    %378 = vmatmul.bf16.gmra.mxu0 %v195
    %v379 = vpop.f32.mrf.mxu0
    %v380 = vadd.f32 %v110, %v379
    %v381 = vpop.f32.mrf.mxu0
    %v382 = vadd.f32 %v110, %v381
    %383 = vmatmul.bf16.gmra.mxu0 %v198
    %v384 = vpop.f32.mrf.mxu0
    %v385 = vadd.f32 %v110, %v384
    %v386 = vpop.f32.mrf.mxu0
    %v387 = vadd.f32 %v110, %v386
    %388 = vmatmul.bf16.gmra.mxu0 %v201
    %v389 = vpop.f32.mrf.mxu0
    %v390 = vadd.f32 %v110, %v389
    %v391 = vpop.f32.mrf.mxu0
    %v392 = vadd.f32 %v110, %v391
    %393 = vmatmul.bf16.gmra.mxu0 %v204
    %v394 = vpop.f32.mrf.mxu0
    %v395 = vadd.f32 %v110, %v394
    %v396 = vpop.f32.mrf.mxu0
    %v397 = vadd.f32 %v110, %v396
    %398 = vmatmul.bf16.gmra.mxu0 %v207
    %v399 = vpop.f32.mrf.mxu0
    %v400 = vadd.f32 %v110, %v399
    %v401 = vpop.f32.mrf.mxu0
    %v402 = vadd.f32 %v110, %v401
    %403 = vmatmul.bf16.gmra.mxu0 %v210
    %v404 = vpop.f32.mrf.mxu0
    %v405 = vadd.f32 %v110, %v404
    %v406 = vpop.f32.mrf.mxu0
    %v407 = vadd.f32 %v110, %v406
    %408 = vmatmul.bf16.gmra.mxu0 %v213
    %v409 = vpop.f32.mrf.mxu0
    %v410 = vadd.f32 %v110, %v409
    %v411 = vpop.f32.mrf.mxu0
    %v412 = vadd.f32 %v110, %v411
    %413 = vdwg.mxu0
    %414 = vmatpush.bf16.msra.mxu0 %v319
    %415 = vmatpush.bf16.msra.mxu0 %v318
    %416 = vmatpush.bf16.msra.mxu0 %v317
    %417 = vmatpush.bf16.msra.mxu0 %v316
    %418 = vmatpush.bf16.msra.mxu0 %v315
    %419 = vmatpush.bf16.msra.mxu0 %v314
    %420 = vmatpush.bf16.msra.mxu0 %v313
    %421 = vmatpush.bf16.msra.mxu0 %v312
    %422 = vmatmul.bf16.gmra.mxu0 %v193
    %v423 = vpop.f32.mrf.mxu0
    %v424 = vadd.f32 %v375, %v423
    %v425 = vpop.f32.mrf.mxu0
    %v426 = vadd.f32 %v377, %v425
    %427 = vmatmul.bf16.gmra.mxu0 %v196
    %v428 = vpop.f32.mrf.mxu0
    %v429 = vadd.f32 %v380, %v428
    %v430 = vpop.f32.mrf.mxu0
    %v431 = vadd.f32 %v382, %v430
    %432 = vmatmul.bf16.gmra.mxu0 %v199
    %v433 = vpop.f32.mrf.mxu0
    %v434 = vadd.f32 %v385, %v433
    %v435 = vpop.f32.mrf.mxu0
    %v436 = vadd.f32 %v387, %v435
    %437 = vmatmul.bf16.gmra.mxu0 %v202
    %v438 = vpop.f32.mrf.mxu0
    %v439 = vadd.f32 %v390, %v438
    %v440 = vpop.f32.mrf.mxu0
    %v441 = vadd.f32 %v392, %v440
    %442 = vmatmul.bf16.gmra.mxu0 %v205
    %v443 = vpop.f32.mrf.mxu0
    %v444 = vadd.f32 %v395, %v443
    %v445 = vpop.f32.mrf.mxu0
    %v446 = vadd.f32 %v397, %v445
    %447 = vmatmul.bf16.gmra.mxu0 %v208
    %v448 = vpop.f32.mrf.mxu0
    %v449 = vadd.f32 %v400, %v448
    %v450 = vpop.f32.mrf.mxu0
    %v451 = vadd.f32 %v402, %v450
    %452 = vmatmul.bf16.gmra.mxu0 %v211
    %v453 = vpop.f32.mrf.mxu0
    %v454 = vadd.f32 %v405, %v453
    %v455 = vpop.f32.mrf.mxu0
    %v456 = vadd.f32 %v407, %v455
    %457 = vmatmul.bf16.gmra.mxu0 %v214
    %v458 = vpop.f32.mrf.mxu0
    %v459 = vadd.f32 %v410, %v458
    %v460 = vpop.f32.mrf.mxu0
    %v461 = vadd.f32 %v412, %v460
    %462 = vdwg.mxu0
    %463 = vmatpush.bf16.msra.mxu0 0
    %464 = vmatpush.bf16.msra.mxu0 0
    %465 = vmatpush.bf16.msra.mxu0 0
    %466 = vmatpush.bf16.msra.mxu0 0
    %467 = vmatpush.bf16.msra.mxu0 0
    %468 = vmatpush.bf16.msra.mxu0 0
    %469 = vmatpush.bf16.msra.mxu0 %v321
    %470 = vmatpush.bf16.msra.mxu0 %v320
    %471 = vmatmul.bf16.gmra.mxu0 %v342
    %v472 = vpop.f32.mrf.mxu0
    %v473 = vadd.f32 %v424, %v472
    %v474 = vpop.f32.mrf.mxu0
    %v475 = vadd.f32 %v426, %v474
    %476 = vmatmul.bf16.gmra.mxu0 %v345
    %v477 = vpop.f32.mrf.mxu0
    %v478 = vadd.f32 %v429, %v477
    %v479 = vpop.f32.mrf.mxu0
    %v480 = vadd.f32 %v431, %v479
    %481 = vmatmul.bf16.gmra.mxu0 %v348
    %v482 = vpop.f32.mrf.mxu0
    %v483 = vadd.f32 %v434, %v482
    %v484 = vpop.f32.mrf.mxu0
    %v485 = vadd.f32 %v436, %v484
    %486 = vmatmul.bf16.gmra.mxu0 %v351
    %v487 = vpop.f32.mrf.mxu0
    %v488 = vadd.f32 %v439, %v487
    %v489 = vpop.f32.mrf.mxu0
    %v490 = vadd.f32 %v441, %v489
    %491 = vmatmul.bf16.gmra.mxu0 %v354
    %v492 = vpop.f32.mrf.mxu0
    %v493 = vadd.f32 %v444, %v492
    %v494 = vpop.f32.mrf.mxu0
    %v495 = vadd.f32 %v446, %v494
    %496 = vmatmul.bf16.gmra.mxu0 %v357
    %v497 = vpop.f32.mrf.mxu0
    %v498 = vadd.f32 %v449, %v497
    %v499 = vpop.f32.mrf.mxu0
    %v500 = vadd.f32 %v451, %v499
    %501 = vmatmul.bf16.gmra.mxu0 %v360
    %v502 = vpop.f32.mrf.mxu0
    %v503 = vadd.f32 %v454, %v502
    %v504 = vpop.f32.mrf.mxu0
    %v505 = vadd.f32 %v456, %v504
    %506 = vmatmul.bf16.gmra.mxu0 %v363
    %v507 = vpop.f32.mrf.mxu0
    %v508 = vadd.f32 %v459, %v507
    %v509 = vpop.f32.mrf.mxu0
    %v510 = vadd.f32 %v461, %v509
    %511 = vdwg.mxu0
    %v512 = vsel %vm340, %v473, 0.0
    %v513 = vsel %vm340, %v475, 0.0
    %v514 = vadd.f32 %v512, %v513
    %v515 = vsel %vm340, %v478, 0.0
    %v516 = vadd.f32 %v514, %v515
    %v517 = vsel %vm340, %v480, 0.0
    %v518 = vadd.f32 %v516, %v517
    %v519 = vsel %vm340, %v483, 0.0
    %v520 = vadd.f32 %v518, %v519
    %v521 = vsel %vm340, %v485, 0.0
    %v522 = vadd.f32 %v520, %v521
    %v523 = vsel %vm340, %v488, 0.0
    %v524 = vadd.f32 %v522, %v523
    %v525 = vsel %vm340, %v490, 0.0
    %v526 = vadd.f32 %v524, %v525
    %v527 = vrot.slane %v526, 4
    %v528 = vadd.f32 %v526, %v527
    %v529 = vrot.slane %v528, 2
    %v530 = vadd.f32 %v528, %v529
    %v531 = vrot.slane %v530, 1
    %v532 = vadd.f32 %v530, %v531
    %v533 = vsel %vm340, %v493, 0.0
    %v534 = vsel %vm340, %v495, 0.0
    %v535 = vadd.f32 %v533, %v534
    %v536 = vsel %vm340, %v498, 0.0
    %v537 = vadd.f32 %v535, %v536
    %v538 = vsel %vm340, %v500, 0.0
    %v539 = vadd.f32 %v537, %v538
    %v540 = vsel %vm340, %v503, 0.0
    %v541 = vadd.f32 %v539, %v540
    %v542 = vsel %vm340, %v505, 0.0
    %v543 = vadd.f32 %v541, %v542
    %v544 = vsel %vm340, %v508, 0.0
    %v545 = vadd.f32 %v543, %v544
    %v546 = vsel %vm340, %v510, 0.0
    %v547 = vadd.f32 %v545, %v546
    %v548 = vrot.slane %v547, 4
    %v549 = vadd.f32 %v547, %v548
    %v550 = vrot.slane %v549, 2
    %v551 = vadd.f32 %v549, %v550
    %v552 = vrot.slane %v551, 1
    %v553 = vadd.f32 %v551, %v552
    %v554 = vrcp.pop 64.0
    %v555 = vmul.f32 64.0, %v554
    %v556 = vsub.f32 1.0, %v555
    %v557 = vmul.f32 %v554, %v556
    %v558 = vadd.f32 %v554, %v557
    %vm559 = vweird.f32 %v554
    %v560 = vsel %vm559, %v554, %v558
    %v561 = vmul.f32 %v532, %v560
    %v562 = vmul.f32 %v553, %v560
    %v563 = vld [vmem:[%s3] sm:$0xff]
    %v564 = vld [vmem:[%s3 + $0x8] sm:$0xff]
    %v565 = vld [vmem:[%s3 + $0x10] sm:$0xff]
    %v566 = vld [vmem:[%s3 + $0x18] sm:$0xff]
    %v567 = vld [vmem:[%s4] sm:$0x1]
    %v569 = vperm.slane %v567, 0
    %vm573 = vcmask 1041409
    %v574 = vsel %vm573, %v562, %v561
    %v575 = vsel %vm340, %v574, 0
    %577 = vmatpush.msra.mxu0 0.0
    %578 = vmatpush.msra.mxu0 0.0
    %579 = vmatpush.msra.mxu0 0.0
    %580 = vmatpush.msra.mxu0 0.0
    %581 = vmatpush.msra.mxu0 0.0
    %582 = vmatpush.msra.mxu0 0.0
    %583 = vmatpush.msra.mxu0 0.0
    %584 = vmatpush.msra.mxu0 0.0
    %585 = vmatpush.msra.mxu0 0.0
    %586 = vmatpush.msra.mxu0 0.0
    %587 = vmatpush.msra.mxu0 0.0
    %588 = vmatpush.msra.mxu0 0.0
    %589 = vmatpush.msra.mxu0 %v566
    %590 = vmatpush.msra.mxu0 %v565
    %591 = vmatpush.msra.mxu0 %v564
    %592 = vmatpush.msra.mxu0 %v563
    %593 = vmatmul.f32.gmra.mxu0 %v575
    %v594 = vpop.f32.mrf.mxu0
    %v595 = vadd.f32 %v569, %v594
    %596 = vdwg.mxu0
    %v597 = vmax.f32 %v595, 0.0
    %v598 = vld [vmem:[%s5] sm:$0xff]
    %v599 = vld [vmem:[%s6] sm:$0x1]
    %v601 = vperm.slane %v599, 0
    %vm603 = vcmask 64512
    %v605 = vsel %vm603, %v597, 0
    %607 = vmatpush.msra.mxu0 0.0
    %608 = vmatpush.msra.mxu0 0.0
    %609 = vmatpush.msra.mxu0 0.0
    %610 = vmatpush.msra.mxu0 0.0
    %611 = vmatpush.msra.mxu0 0.0
    %612 = vmatpush.msra.mxu0 0.0
    %613 = vmatpush.msra.mxu0 0.0
    %614 = vmatpush.msra.mxu0 0.0
    %615 = vmatpush.msra.mxu0 0.0
    %616 = vmatpush.msra.mxu0 0.0
    %617 = vmatpush.msra.mxu0 0.0
    %618 = vmatpush.msra.mxu0 0.0
    %619 = vmatpush.msra.mxu0 0.0
    %620 = vmatpush.msra.mxu0 0.0
    %621 = vmatpush.msra.mxu0 0.0
    %622 = vmatpush.msra.mxu0 %v598
    %623 = vmatmul.f32.gmra.mxu0 %v605
    %v624 = vpop.f32.mrf.mxu0
    %v625 = vadd.f32 %v601, %v624
    %626 = vdwg.mxu0
    %v627 = vxor.u32 %v625, 2147483648
    %v628 = vmul.f32 %v627, 1.442695
    %v629 = vpow.pop %v628
    %v630 = vadd.f32 %v629, 1.0
    %v631 = vrcp.pop %v630
    %v632 = vmul.f32 %v630, %v631
    %v633 = vsub.f32 1.0, %v632
    %v634 = vmul.f32 %v631, %v633
    %v635 = vadd.f32 %v631, %v634
    %vm636 = vweird.f32 %v630
    %vm637 = vweird.f32 %v631
    %vm638 = vmor %vm636, %vm637
    %v639 = vsel %vm638, %v631, %v635
    %v640 = vand.u32 2147483647, %v630
    %vm641 = vcmp.eq.f32.partialorder %v640, 8.507059e+37
    %v642 = vand.u32 %v630, 2147483648
    %v643 = vor.u32 1.1754944e-38, %v642
    %v644 = vsel %vm641, %v643, %v639
    %v645 = vmul.f32 1.0, %v644
    %v647 = vrot.slane %v645, 1
    %v648 = vperm.slane %v645, 0
    %v649 = vperm.slane %v647, 0
    %v652 = vmul.f32 %v473, %v648
    %v653 = vmul.f32 %v475, %v648
    %v654 = vmul.f32 %v478, %v648
    %v655 = vmul.f32 %v480, %v648
    %v656 = vmul.f32 %v483, %v648
    %v657 = vmul.f32 %v485, %v648
    %v658 = vmul.f32 %v488, %v648
    %v659 = vmul.f32 %v490, %v648
    %v660 = vmul.f32 %v493, %v649
    %v661 = vmul.f32 %v495, %v649
    %v662 = vmul.f32 %v498, %v649
    %v663 = vmul.f32 %v500, %v649
    %v664 = vmul.f32 %v503, %v649
    %v665 = vmul.f32 %v505, %v649
    %v666 = vmul.f32 %v508, %v649
    %v667 = vmul.f32 %v510, %v649
    %v668 = vpack.c.bf16 %v653, %v652
    %v669 = vpack.c.bf16 %v655, %v654
    %v670 = vpack.c.bf16 %v657, %v656
    %v671 = vpack.c.bf16 %v659, %v658
    %v672 = vpack.c.bf16 %v661, %v660
    %v673 = vpack.c.bf16 %v663, %v662
    %v674 = vpack.c.bf16 %v665, %v664
    %v675 = vpack.c.bf16 %v667, %v666
    %v676 = vld [vmem:[%s7] sm:$0xf]
    %v677 = vld [vmem:[%s7 + $0x4] sm:$0xf]
    %v678 = vld [vmem:[%s7 + $0x8] sm:$0xf]
    %v679 = vld [vmem:[%s7 + $0xc] sm:$0xf]
    %v680 = vld [vmem:[%s8] sm:$0x1]
    %v682 = vperm.slane %v680, 0
    %v688 = vunpack.c.l.b16 %v676
    %v689 = vunpack.c.l.b16 %v677
    %v690 = vunpack.c.l.b16 %v678
    %v691 = vunpack.c.l.b16 %v679
    %v692 = vpack.c.b16 %v689, %v688
    %v693 = vpack.c.b16 %v691, %v690
    %v697 = vsel %vm340, %v668, 0
    %v700 = vsel %vm340, %v669, 0
    %v703 = vsel %vm340, %v670, 0
    %v706 = vsel %vm340, %v671, 0
    %v709 = vsel %vm340, %v672, 0
    %v712 = vsel %vm340, %v673, 0
    %v715 = vsel %vm340, %v674, 0
    %v718 = vsel %vm340, %v675, 0
    %720 = vmatpush.bf16.msra.mxu0 0
    %721 = vmatpush.bf16.msra.mxu0 0
    %722 = vmatpush.bf16.msra.mxu0 0
    %723 = vmatpush.bf16.msra.mxu0 0
    %724 = vmatpush.bf16.msra.mxu0 0
    %725 = vmatpush.bf16.msra.mxu0 0
    %726 = vmatpush.bf16.msra.mxu0 %v693
    %727 = vmatpush.bf16.msra.mxu0 %v692
    %728 = vmatmul.bf16.gmra.mxu0 %v697
    %v729 = vpop.f32.mrf.mxu0
    %v730 = vadd.f32 %v682, %v729
    %v731 = vpop.f32.mrf.mxu0
    %v732 = vadd.f32 %v682, %v731
    %733 = vmatmul.bf16.gmra.mxu0 %v700
    %v734 = vpop.f32.mrf.mxu0
    %v735 = vadd.f32 %v682, %v734
    %v736 = vpop.f32.mrf.mxu0
    %v737 = vadd.f32 %v682, %v736
    %738 = vmatmul.bf16.gmra.mxu0 %v703
    %v739 = vpop.f32.mrf.mxu0
    %v740 = vadd.f32 %v682, %v739
    %v741 = vpop.f32.mrf.mxu0
    %v742 = vadd.f32 %v682, %v741
    %743 = vmatmul.bf16.gmra.mxu0 %v706
    %v744 = vpop.f32.mrf.mxu0
    %v745 = vadd.f32 %v682, %v744
    %v746 = vpop.f32.mrf.mxu0
    %v747 = vadd.f32 %v682, %v746
    %748 = vmatmul.bf16.gmra.mxu0 %v709
    %v749 = vpop.f32.mrf.mxu0
    %v750 = vadd.f32 %v682, %v749
    %v751 = vpop.f32.mrf.mxu0
    %v752 = vadd.f32 %v682, %v751
    %753 = vmatmul.bf16.gmra.mxu0 %v712
    %v754 = vpop.f32.mrf.mxu0
    %v755 = vadd.f32 %v682, %v754
    %v756 = vpop.f32.mrf.mxu0
    %v757 = vadd.f32 %v682, %v756
    %758 = vmatmul.bf16.gmra.mxu0 %v715
    %v759 = vpop.f32.mrf.mxu0
    %v760 = vadd.f32 %v682, %v759
    %v761 = vpop.f32.mrf.mxu0
    %v762 = vadd.f32 %v682, %v761
    %763 = vmatmul.bf16.gmra.mxu0 %v718
    %v764 = vpop.f32.mrf.mxu0
    %v765 = vadd.f32 %v682, %v764
    %v766 = vpop.f32.mrf.mxu0
    %v767 = vadd.f32 %v682, %v766
    %768 = vdwg.mxu0
    %v769 = vmul.f32 %v730, 0.5
    %v770 = vmul.f32 %v732, 0.5
    %v771 = vmul.f32 %v735, 0.5
    %v772 = vmul.f32 %v737, 0.5
    %v773 = vmul.f32 %v740, 0.5
    %v774 = vmul.f32 %v742, 0.5
    %v775 = vmul.f32 %v745, 0.5
    %v776 = vmul.f32 %v747, 0.5
    %v777 = vmul.f32 %v750, 0.5
    %v778 = vmul.f32 %v752, 0.5
    %v779 = vmul.f32 %v755, 0.5
    %v780 = vmul.f32 %v757, 0.5
    %v781 = vmul.f32 %v760, 0.5
    %v782 = vmul.f32 %v762, 0.5
    %v783 = vmul.f32 %v765, 0.5
    %v784 = vmul.f32 %v767, 0.5
    %v785 = vmul.f32 %v730, 0.70710677
    %v786 = vmul.f32 %v732, 0.70710677
    %v787 = vmul.f32 %v735, 0.70710677
    %v788 = vmul.f32 %v737, 0.70710677
    %v789 = vmul.f32 %v740, 0.70710677
    %v790 = vmul.f32 %v742, 0.70710677
    %v791 = vmul.f32 %v745, 0.70710677
    %v792 = vmul.f32 %v747, 0.70710677
    %v793 = vmul.f32 %v750, 0.70710677
    %v794 = vmul.f32 %v752, 0.70710677
    %v795 = vmul.f32 %v755, 0.70710677
    %v796 = vmul.f32 %v757, 0.70710677
    %v797 = vmul.f32 %v760, 0.70710677
    %v798 = vmul.f32 %v762, 0.70710677
    %v799 = vmul.f32 %v765, 0.70710677
    %v800 = vmul.f32 %v767, 0.70710677
    %v801 = vand.u32 2147483647, %v785
    %v802 = vand.u32 2147483647, %v786
    %v803 = vand.u32 2147483647, %v787
    %v804 = vand.u32 2147483647, %v788
    %v805 = vand.u32 2147483647, %v789
    %v806 = vand.u32 2147483647, %v790
    %v807 = vand.u32 2147483647, %v791
    %v808 = vand.u32 2147483647, %v792
    %v809 = vand.u32 2147483647, %v793
    %v810 = vand.u32 2147483647, %v794
    %v811 = vand.u32 2147483647, %v795
    %v812 = vand.u32 2147483647, %v796
    %v813 = vand.u32 2147483647, %v797
    %v814 = vand.u32 2147483647, %v798
    %v815 = vand.u32 2147483647, %v799
    %v816 = vand.u32 2147483647, %v800
    %v817 = vmul.f32 %v801, 0.3275911
    %v818 = vmul.f32 %v802, 0.3275911
    %v819 = vmul.f32 %v803, 0.3275911
    %v820 = vmul.f32 %v804, 0.3275911
    %v821 = vmul.f32 %v805, 0.3275911
    %v822 = vmul.f32 %v806, 0.3275911
    %v823 = vmul.f32 %v807, 0.3275911
    %v824 = vmul.f32 %v808, 0.3275911
    %v825 = vmul.f32 %v809, 0.3275911
    %v826 = vmul.f32 %v810, 0.3275911
    %v827 = vmul.f32 %v811, 0.3275911
    %v828 = vmul.f32 %v812, 0.3275911
    %v829 = vmul.f32 %v813, 0.3275911
    %v830 = vmul.f32 %v814, 0.3275911
    %v831 = vmul.f32 %v815, 0.3275911
    %v832 = vmul.f32 %v816, 0.3275911
    %v833 = vadd.f32 %v817, 1.0
    %v834 = vadd.f32 %v818, 1.0
    %v835 = vadd.f32 %v819, 1.0
    %v836 = vadd.f32 %v820, 1.0
    %v837 = vadd.f32 %v821, 1.0
    %v838 = vadd.f32 %v822, 1.0
    %v839 = vadd.f32 %v823, 1.0
    %v840 = vadd.f32 %v824, 1.0
    %v841 = vadd.f32 %v825, 1.0
    %v842 = vadd.f32 %v826, 1.0
    %v843 = vadd.f32 %v827, 1.0
    %v844 = vadd.f32 %v828, 1.0
    %v845 = vadd.f32 %v829, 1.0
    %v846 = vadd.f32 %v830, 1.0
    %v847 = vadd.f32 %v831, 1.0
    %v848 = vadd.f32 %v832, 1.0
    %v849 = vrcp.pop %v833
    %v850 = vmul.f32 %v833, %v849
    %v851 = vsub.f32 1.0, %v850
    %v852 = vmul.f32 %v849, %v851
    %v853 = vadd.f32 %v849, %v852
    %vm854 = vweird.f32 %v833
    %vm855 = vweird.f32 %v849
    %vm856 = vmor %vm854, %vm855
    %v857 = vsel %vm856, %v849, %v853
    %v858 = vand.u32 2147483647, %v833
    %vm859 = vcmp.eq.f32.partialorder %v858, 8.507059e+37
    %v860 = vand.u32 %v833, 2147483648
    %v861 = vor.u32 1.1754944e-38, %v860
    %v862 = vsel %vm859, %v861, %v857
    %v863 = vmul.f32 1.0, %v862
    %v864 = vrcp.pop %v834
    %v865 = vmul.f32 %v834, %v864
    %v866 = vsub.f32 1.0, %v865
    %v867 = vmul.f32 %v864, %v866
    %v868 = vadd.f32 %v864, %v867
    %vm869 = vweird.f32 %v834
    %vm870 = vweird.f32 %v864
    %vm871 = vmor %vm869, %vm870
    %v872 = vsel %vm871, %v864, %v868
    %v873 = vand.u32 2147483647, %v834
    %vm874 = vcmp.eq.f32.partialorder %v873, 8.507059e+37
    %v875 = vand.u32 %v834, 2147483648
    %v876 = vor.u32 1.1754944e-38, %v875
    %v877 = vsel %vm874, %v876, %v872
    %v878 = vmul.f32 1.0, %v877
    %v879 = vrcp.pop %v835
    %v880 = vmul.f32 %v835, %v879
    %v881 = vsub.f32 1.0, %v880
    %v882 = vmul.f32 %v879, %v881
    %v883 = vadd.f32 %v879, %v882
    %vm884 = vweird.f32 %v835
    %vm885 = vweird.f32 %v879
    %vm886 = vmor %vm884, %vm885
    %v887 = vsel %vm886, %v879, %v883
    %v888 = vand.u32 2147483647, %v835
    %vm889 = vcmp.eq.f32.partialorder %v888, 8.507059e+37
    %v890 = vand.u32 %v835, 2147483648
    %v891 = vor.u32 1.1754944e-38, %v890
    %v892 = vsel %vm889, %v891, %v887
    %v893 = vmul.f32 1.0, %v892
    %v894 = vrcp.pop %v836
    %v895 = vmul.f32 %v836, %v894
    %v896 = vsub.f32 1.0, %v895
    %v897 = vmul.f32 %v894, %v896
    %v898 = vadd.f32 %v894, %v897
    %vm899 = vweird.f32 %v836
    %vm900 = vweird.f32 %v894
    %vm901 = vmor %vm899, %vm900
    %v902 = vsel %vm901, %v894, %v898
    %v903 = vand.u32 2147483647, %v836
    %vm904 = vcmp.eq.f32.partialorder %v903, 8.507059e+37
    %v905 = vand.u32 %v836, 2147483648
    %v906 = vor.u32 1.1754944e-38, %v905
    %v907 = vsel %vm904, %v906, %v902
    %v908 = vmul.f32 1.0, %v907
    %v909 = vrcp.pop %v837
    %v910 = vmul.f32 %v837, %v909
    %v911 = vsub.f32 1.0, %v910
    %v912 = vmul.f32 %v909, %v911
    %v913 = vadd.f32 %v909, %v912
    %vm914 = vweird.f32 %v837
    %vm915 = vweird.f32 %v909
    %vm916 = vmor %vm914, %vm915
    %v917 = vsel %vm916, %v909, %v913
    %v918 = vand.u32 2147483647, %v837
    %vm919 = vcmp.eq.f32.partialorder %v918, 8.507059e+37
    %v920 = vand.u32 %v837, 2147483648
    %v921 = vor.u32 1.1754944e-38, %v920
    %v922 = vsel %vm919, %v921, %v917
    %v923 = vmul.f32 1.0, %v922
    %v924 = vrcp.pop %v838
    %v925 = vmul.f32 %v838, %v924
    %v926 = vsub.f32 1.0, %v925
    %v927 = vmul.f32 %v924, %v926
    %v928 = vadd.f32 %v924, %v927
    %vm929 = vweird.f32 %v838
    %vm930 = vweird.f32 %v924
    %vm931 = vmor %vm929, %vm930
    %v932 = vsel %vm931, %v924, %v928
    %v933 = vand.u32 2147483647, %v838
    %vm934 = vcmp.eq.f32.partialorder %v933, 8.507059e+37
    %v935 = vand.u32 %v838, 2147483648
    %v936 = vor.u32 1.1754944e-38, %v935
    %v937 = vsel %vm934, %v936, %v932
    %v938 = vmul.f32 1.0, %v937
    %v939 = vrcp.pop %v839
    %v940 = vmul.f32 %v839, %v939
    %v941 = vsub.f32 1.0, %v940
    %v942 = vmul.f32 %v939, %v941
    %v943 = vadd.f32 %v939, %v942
    %vm944 = vweird.f32 %v839
    %vm945 = vweird.f32 %v939
    %vm946 = vmor %vm944, %vm945
    %v947 = vsel %vm946, %v939, %v943
    %v948 = vand.u32 2147483647, %v839
    %vm949 = vcmp.eq.f32.partialorder %v948, 8.507059e+37
    %v950 = vand.u32 %v839, 2147483648
    %v951 = vor.u32 1.1754944e-38, %v950
    %v952 = vsel %vm949, %v951, %v947
    %v953 = vmul.f32 1.0, %v952
    %v954 = vrcp.pop %v840
    %v955 = vmul.f32 %v840, %v954
    %v956 = vsub.f32 1.0, %v955
    %v957 = vmul.f32 %v954, %v956
    %v958 = vadd.f32 %v954, %v957
    %vm959 = vweird.f32 %v840
    %vm960 = vweird.f32 %v954
    %vm961 = vmor %vm959, %vm960
    %v962 = vsel %vm961, %v954, %v958
    %v963 = vand.u32 2147483647, %v840
    %vm964 = vcmp.eq.f32.partialorder %v963, 8.507059e+37
    %v965 = vand.u32 %v840, 2147483648
    %v966 = vor.u32 1.1754944e-38, %v965
    %v967 = vsel %vm964, %v966, %v962
    %v968 = vmul.f32 1.0, %v967
    %v969 = vrcp.pop %v841
    %v970 = vmul.f32 %v841, %v969
    %v971 = vsub.f32 1.0, %v970
    %v972 = vmul.f32 %v969, %v971
    %v973 = vadd.f32 %v969, %v972
    %vm974 = vweird.f32 %v841
    %vm975 = vweird.f32 %v969
    %vm976 = vmor %vm974, %vm975
    %v977 = vsel %vm976, %v969, %v973
    %v978 = vand.u32 2147483647, %v841
    %vm979 = vcmp.eq.f32.partialorder %v978, 8.507059e+37
    %v980 = vand.u32 %v841, 2147483648
    %v981 = vor.u32 1.1754944e-38, %v980
    %v982 = vsel %vm979, %v981, %v977
    %v983 = vmul.f32 1.0, %v982
    %v984 = vrcp.pop %v842
    %v985 = vmul.f32 %v842, %v984
    %v986 = vsub.f32 1.0, %v985
    %v987 = vmul.f32 %v984, %v986
    %v988 = vadd.f32 %v984, %v987
    %vm989 = vweird.f32 %v842
    %vm990 = vweird.f32 %v984
    %vm991 = vmor %vm989, %vm990
    %v992 = vsel %vm991, %v984, %v988
    %v993 = vand.u32 2147483647, %v842
    %vm994 = vcmp.eq.f32.partialorder %v993, 8.507059e+37
    %v995 = vand.u32 %v842, 2147483648
    %v996 = vor.u32 1.1754944e-38, %v995
    %v997 = vsel %vm994, %v996, %v992
    %v998 = vmul.f32 1.0, %v997
    %v999 = vrcp.pop %v843
    %v1000 = vmul.f32 %v843, %v999
    %v1001 = vsub.f32 1.0, %v1000
    %v1002 = vmul.f32 %v999, %v1001
    %v1003 = vadd.f32 %v999, %v1002
    %vm1004 = vweird.f32 %v843
    %vm1005 = vweird.f32 %v999
    %vm1006 = vmor %vm1004, %vm1005
    %v1007 = vsel %vm1006, %v999, %v1003
    %v1008 = vand.u32 2147483647, %v843
    %vm1009 = vcmp.eq.f32.partialorder %v1008, 8.507059e+37
    %v1010 = vand.u32 %v843, 2147483648
    %v1011 = vor.u32 1.1754944e-38, %v1010
    %v1012 = vsel %vm1009, %v1011, %v1007
    %v1013 = vmul.f32 1.0, %v1012
    %v1014 = vrcp.pop %v844
    %v1015 = vmul.f32 %v844, %v1014
    %v1016 = vsub.f32 1.0, %v1015
    %v1017 = vmul.f32 %v1014, %v1016
    %v1018 = vadd.f32 %v1014, %v1017
    %vm1019 = vweird.f32 %v844
    %vm1020 = vweird.f32 %v1014
    %vm1021 = vmor %vm1019, %vm1020
    %v1022 = vsel %vm1021, %v1014, %v1018
    %v1023 = vand.u32 2147483647, %v844
    %vm1024 = vcmp.eq.f32.partialorder %v1023, 8.507059e+37
    %v1025 = vand.u32 %v844, 2147483648
    %v1026 = vor.u32 1.1754944e-38, %v1025
    %v1027 = vsel %vm1024, %v1026, %v1022
    %v1028 = vmul.f32 1.0, %v1027
    %v1029 = vrcp.pop %v845
    %v1030 = vmul.f32 %v845, %v1029
    %v1031 = vsub.f32 1.0, %v1030
    %v1032 = vmul.f32 %v1029, %v1031
    %v1033 = vadd.f32 %v1029, %v1032
    %vm1034 = vweird.f32 %v845
    %vm1035 = vweird.f32 %v1029
    %vm1036 = vmor %vm1034, %vm1035
    %v1037 = vsel %vm1036, %v1029, %v1033
    %v1038 = vand.u32 2147483647, %v845
    %vm1039 = vcmp.eq.f32.partialorder %v1038, 8.507059e+37
    %v1040 = vand.u32 %v845, 2147483648
    %v1041 = vor.u32 1.1754944e-38, %v1040
    %v1042 = vsel %vm1039, %v1041, %v1037
    %v1043 = vmul.f32 1.0, %v1042
    %v1044 = vrcp.pop %v846
    %v1045 = vmul.f32 %v846, %v1044
    %v1046 = vsub.f32 1.0, %v1045
    %v1047 = vmul.f32 %v1044, %v1046
    %v1048 = vadd.f32 %v1044, %v1047
    %vm1049 = vweird.f32 %v846
    %vm1050 = vweird.f32 %v1044
    %vm1051 = vmor %vm1049, %vm1050
    %v1052 = vsel %vm1051, %v1044, %v1048
    %v1053 = vand.u32 2147483647, %v846
    %vm1054 = vcmp.eq.f32.partialorder %v1053, 8.507059e+37
    %v1055 = vand.u32 %v846, 2147483648
    %v1056 = vor.u32 1.1754944e-38, %v1055
    %v1057 = vsel %vm1054, %v1056, %v1052
    %v1058 = vmul.f32 1.0, %v1057
    %v1059 = vrcp.pop %v847
    %v1060 = vmul.f32 %v847, %v1059
    %v1061 = vsub.f32 1.0, %v1060
    %v1062 = vmul.f32 %v1059, %v1061
    %v1063 = vadd.f32 %v1059, %v1062
    %vm1064 = vweird.f32 %v847
    %vm1065 = vweird.f32 %v1059
    %vm1066 = vmor %vm1064, %vm1065
    %v1067 = vsel %vm1066, %v1059, %v1063
    %v1068 = vand.u32 2147483647, %v847
    %vm1069 = vcmp.eq.f32.partialorder %v1068, 8.507059e+37
    %v1070 = vand.u32 %v847, 2147483648
    %v1071 = vor.u32 1.1754944e-38, %v1070
    %v1072 = vsel %vm1069, %v1071, %v1067
    %v1073 = vmul.f32 1.0, %v1072
    %v1074 = vrcp.pop %v848
    %v1075 = vmul.f32 %v848, %v1074
    %v1076 = vsub.f32 1.0, %v1075
    %v1077 = vmul.f32 %v1074, %v1076
    %v1078 = vadd.f32 %v1074, %v1077
    %vm1079 = vweird.f32 %v848
    %vm1080 = vweird.f32 %v1074
    %vm1081 = vmor %vm1079, %vm1080
    %v1082 = vsel %vm1081, %v1074, %v1078
    %v1083 = vand.u32 2147483647, %v848
    %vm1084 = vcmp.eq.f32.partialorder %v1083, 8.507059e+37
    %v1085 = vand.u32 %v848, 2147483648
    %v1086 = vor.u32 1.1754944e-38, %v1085
    %v1087 = vsel %vm1084, %v1086, %v1082
    %v1088 = vmul.f32 1.0, %v1087
    %v1089 = vmul.f32 %v863, 1.0614054
    %v1090 = vmul.f32 %v878, 1.0614054
    %v1091 = vmul.f32 %v893, 1.0614054
    %v1092 = vmul.f32 %v908, 1.0614054
    %v1093 = vmul.f32 %v923, 1.0614054
    %v1094 = vmul.f32 %v938, 1.0614054
    %v1095 = vmul.f32 %v953, 1.0614054
    %v1096 = vmul.f32 %v968, 1.0614054
    %v1097 = vmul.f32 %v983, 1.0614054
    %v1098 = vmul.f32 %v998, 1.0614054
    %v1099 = vmul.f32 %v1013, 1.0614054
    %v1100 = vmul.f32 %v1028, 1.0614054
    %v1101 = vmul.f32 %v1043, 1.0614054
    %v1102 = vmul.f32 %v1058, 1.0614054
    %v1103 = vmul.f32 %v1073, 1.0614054
    %v1104 = vmul.f32 %v1088, 1.0614054
    %v1105 = vadd.f32 %v1089, -1.4531521
    %v1106 = vadd.f32 %v1090, -1.4531521
    %v1107 = vadd.f32 %v1091, -1.4531521
    %v1108 = vadd.f32 %v1092, -1.4531521
    %v1109 = vadd.f32 %v1093, -1.4531521
    %v1110 = vadd.f32 %v1094, -1.4531521
    %v1111 = vadd.f32 %v1095, -1.4531521
    %v1112 = vadd.f32 %v1096, -1.4531521
    %v1113 = vadd.f32 %v1097, -1.4531521
    %v1114 = vadd.f32 %v1098, -1.4531521
    %v1115 = vadd.f32 %v1099, -1.4531521
    %v1116 = vadd.f32 %v1100, -1.4531521
    %v1117 = vadd.f32 %v1101, -1.4531521
    %v1118 = vadd.f32 %v1102, -1.4531521
    %v1119 = vadd.f32 %v1103, -1.4531521
    %v1120 = vadd.f32 %v1104, -1.4531521
    %v1121 = vmul.f32 %v1105, %v863
    %v1122 = vmul.f32 %v1106, %v878
    %v1123 = vmul.f32 %v1107, %v893
    %v1124 = vmul.f32 %v1108, %v908
    %v1125 = vmul.f32 %v1109, %v923
    %v1126 = vmul.f32 %v1110, %v938
    %v1127 = vmul.f32 %v1111, %v953
    %v1128 = vmul.f32 %v1112, %v968
    %v1129 = vmul.f32 %v1113, %v983
    %v1130 = vmul.f32 %v1114, %v998
    %v1131 = vmul.f32 %v1115, %v1013
    %v1132 = vmul.f32 %v1116, %v1028
    %v1133 = vmul.f32 %v1117, %v1043
    %v1134 = vmul.f32 %v1118, %v1058
    %v1135 = vmul.f32 %v1119, %v1073
    %v1136 = vmul.f32 %v1120, %v1088
    %v1137 = vadd.f32 %v1121, 1.4214138
    %v1138 = vadd.f32 %v1122, 1.4214138
    %v1139 = vadd.f32 %v1123, 1.4214138
    %v1140 = vadd.f32 %v1124, 1.4214138
    %v1141 = vadd.f32 %v1125, 1.4214138
    %v1142 = vadd.f32 %v1126, 1.4214138
    %v1143 = vadd.f32 %v1127, 1.4214138
    %v1144 = vadd.f32 %v1128, 1.4214138
    %v1145 = vadd.f32 %v1129, 1.4214138
    %v1146 = vadd.f32 %v1130, 1.4214138
    %v1147 = vadd.f32 %v1131, 1.4214138
    %v1148 = vadd.f32 %v1132, 1.4214138
    %v1149 = vadd.f32 %v1133, 1.4214138
    %v1150 = vadd.f32 %v1134, 1.4214138
    %v1151 = vadd.f32 %v1135, 1.4214138
    %v1152 = vadd.f32 %v1136, 1.4214138
    %v1153 = vmul.f32 %v1137, %v863
    %v1154 = vmul.f32 %v1138, %v878
    %v1155 = vmul.f32 %v1139, %v893
    %v1156 = vmul.f32 %v1140, %v908
    %v1157 = vmul.f32 %v1141, %v923
    %v1158 = vmul.f32 %v1142, %v938
    %v1159 = vmul.f32 %v1143, %v953
    %v1160 = vmul.f32 %v1144, %v968
    %v1161 = vmul.f32 %v1145, %v983
    %v1162 = vmul.f32 %v1146, %v998
    %v1163 = vmul.f32 %v1147, %v1013
    %v1164 = vmul.f32 %v1148, %v1028
    %v1165 = vmul.f32 %v1149, %v1043
    %v1166 = vmul.f32 %v1150, %v1058
    %v1167 = vmul.f32 %v1151, %v1073
    %v1168 = vmul.f32 %v1152, %v1088
    %v1169 = vadd.f32 %v1153, -0.28449672
    %v1170 = vadd.f32 %v1154, -0.28449672
    %v1171 = vadd.f32 %v1155, -0.28449672
    %v1172 = vadd.f32 %v1156, -0.28449672
    %v1173 = vadd.f32 %v1157, -0.28449672
    %v1174 = vadd.f32 %v1158, -0.28449672
    %v1175 = vadd.f32 %v1159, -0.28449672
    %v1176 = vadd.f32 %v1160, -0.28449672
    %v1177 = vadd.f32 %v1161, -0.28449672
    %v1178 = vadd.f32 %v1162, -0.28449672
    %v1179 = vadd.f32 %v1163, -0.28449672
    %v1180 = vadd.f32 %v1164, -0.28449672
    %v1181 = vadd.f32 %v1165, -0.28449672
    %v1182 = vadd.f32 %v1166, -0.28449672
    %v1183 = vadd.f32 %v1167, -0.28449672
    %v1184 = vadd.f32 %v1168, -0.28449672
    %v1185 = vmul.f32 %v1169, %v863
    %v1186 = vmul.f32 %v1170, %v878
    %v1187 = vmul.f32 %v1171, %v893
    %v1188 = vmul.f32 %v1172, %v908
    %v1189 = vmul.f32 %v1173, %v923
    %v1190 = vmul.f32 %v1174, %v938
    %v1191 = vmul.f32 %v1175, %v953
    %v1192 = vmul.f32 %v1176, %v968
    %v1193 = vmul.f32 %v1177, %v983
    %v1194 = vmul.f32 %v1178, %v998
    %v1195 = vmul.f32 %v1179, %v1013
    %v1196 = vmul.f32 %v1180, %v1028
    %v1197 = vmul.f32 %v1181, %v1043
    %v1198 = vmul.f32 %v1182, %v1058
    %v1199 = vmul.f32 %v1183, %v1073
    %v1200 = vmul.f32 %v1184, %v1088
    %v1201 = vadd.f32 %v1185, 0.2548296
    %v1202 = vadd.f32 %v1186, 0.2548296
    %v1203 = vadd.f32 %v1187, 0.2548296
    %v1204 = vadd.f32 %v1188, 0.2548296
    %v1205 = vadd.f32 %v1189, 0.2548296
    %v1206 = vadd.f32 %v1190, 0.2548296
    %v1207 = vadd.f32 %v1191, 0.2548296
    %v1208 = vadd.f32 %v1192, 0.2548296
    %v1209 = vadd.f32 %v1193, 0.2548296
    %v1210 = vadd.f32 %v1194, 0.2548296
    %v1211 = vadd.f32 %v1195, 0.2548296
    %v1212 = vadd.f32 %v1196, 0.2548296
    %v1213 = vadd.f32 %v1197, 0.2548296
    %v1214 = vadd.f32 %v1198, 0.2548296
    %v1215 = vadd.f32 %v1199, 0.2548296
    %v1216 = vadd.f32 %v1200, 0.2548296
    %v1217 = vmul.f32 %v1201, %v863
    %v1218 = vmul.f32 %v1202, %v878
    %v1219 = vmul.f32 %v1203, %v893
    %v1220 = vmul.f32 %v1204, %v908
    %v1221 = vmul.f32 %v1205, %v923
    %v1222 = vmul.f32 %v1206, %v938
    %v1223 = vmul.f32 %v1207, %v953
    %v1224 = vmul.f32 %v1208, %v968
    %v1225 = vmul.f32 %v1209, %v983
    %v1226 = vmul.f32 %v1210, %v998
    %v1227 = vmul.f32 %v1211, %v1013
    %v1228 = vmul.f32 %v1212, %v1028
    %v1229 = vmul.f32 %v1213, %v1043
    %v1230 = vmul.f32 %v1214, %v1058
    %v1231 = vmul.f32 %v1215, %v1073
    %v1232 = vmul.f32 %v1216, %v1088
    %v1233 = vsub.f32 0.0, %v801
    %v1234 = vsub.f32 0.0, %v802
    %v1235 = vsub.f32 0.0, %v803
    %v1236 = vsub.f32 0.0, %v804
    %v1237 = vsub.f32 0.0, %v805
    %v1238 = vsub.f32 0.0, %v806
    %v1239 = vsub.f32 0.0, %v807
    %v1240 = vsub.f32 0.0, %v808
    %v1241 = vsub.f32 0.0, %v809
    %v1242 = vsub.f32 0.0, %v810
    %v1243 = vsub.f32 0.0, %v811
    %v1244 = vsub.f32 0.0, %v812
    %v1245 = vsub.f32 0.0, %v813
    %v1246 = vsub.f32 0.0, %v814
    %v1247 = vsub.f32 0.0, %v815
    %v1248 = vsub.f32 0.0, %v816
    %v1249 = vmul.f32 %v1233, %v801
    %v1250 = vmul.f32 %v1234, %v802
    %v1251 = vmul.f32 %v1235, %v803
    %v1252 = vmul.f32 %v1236, %v804
    %v1253 = vmul.f32 %v1237, %v805
    %v1254 = vmul.f32 %v1238, %v806
    %v1255 = vmul.f32 %v1239, %v807
    %v1256 = vmul.f32 %v1240, %v808
    %v1257 = vmul.f32 %v1241, %v809
    %v1258 = vmul.f32 %v1242, %v810
    %v1259 = vmul.f32 %v1243, %v811
    %v1260 = vmul.f32 %v1244, %v812
    %v1261 = vmul.f32 %v1245, %v813
    %v1262 = vmul.f32 %v1246, %v814
    %v1263 = vmul.f32 %v1247, %v815
    %v1264 = vmul.f32 %v1248, %v816
    %v1265 = vmul.f32 %v1249, 1.442695
    %v1266 = vpow.pop %v1265
    %v1267 = vmul.f32 %v1250, 1.442695
    %v1268 = vpow.pop %v1267
    %v1269 = vmul.f32 %v1251, 1.442695
    %v1270 = vpow.pop %v1269
    %v1271 = vmul.f32 %v1252, 1.442695
    %v1272 = vpow.pop %v1271
    %v1273 = vmul.f32 %v1253, 1.442695
    %v1274 = vpow.pop %v1273
    %v1275 = vmul.f32 %v1254, 1.442695
    %v1276 = vpow.pop %v1275
    %v1277 = vmul.f32 %v1255, 1.442695
    %v1278 = vpow.pop %v1277
    %v1279 = vmul.f32 %v1256, 1.442695
    %v1280 = vpow.pop %v1279
    %v1281 = vmul.f32 %v1257, 1.442695
    %v1282 = vpow.pop %v1281
    %v1283 = vmul.f32 %v1258, 1.442695
    %v1284 = vpow.pop %v1283
    %v1285 = vmul.f32 %v1259, 1.442695
    %v1286 = vpow.pop %v1285
    %v1287 = vmul.f32 %v1260, 1.442695
    %v1288 = vpow.pop %v1287
    %v1289 = vmul.f32 %v1261, 1.442695
    %v1290 = vpow.pop %v1289
    %v1291 = vmul.f32 %v1262, 1.442695
    %v1292 = vpow.pop %v1291
    %v1293 = vmul.f32 %v1263, 1.442695
    %v1294 = vpow.pop %v1293
    %v1295 = vmul.f32 %v1264, 1.442695
    %v1296 = vpow.pop %v1295
    %v1297 = vmul.f32 %v1217, %v1266
    %v1298 = vmul.f32 %v1218, %v1268
    %v1299 = vmul.f32 %v1219, %v1270
    %v1300 = vmul.f32 %v1220, %v1272
    %v1301 = vmul.f32 %v1221, %v1274
    %v1302 = vmul.f32 %v1222, %v1276
    %v1303 = vmul.f32 %v1223, %v1278
    %v1304 = vmul.f32 %v1224, %v1280
    %v1305 = vmul.f32 %v1225, %v1282
    %v1306 = vmul.f32 %v1226, %v1284
    %v1307 = vmul.f32 %v1227, %v1286
    %v1308 = vmul.f32 %v1228, %v1288
    %v1309 = vmul.f32 %v1229, %v1290
    %v1310 = vmul.f32 %v1230, %v1292
    %v1311 = vmul.f32 %v1231, %v1294
    %v1312 = vmul.f32 %v1232, %v1296
    %v1313 = vsub.f32 1.0, %v1297
    %v1314 = vsub.f32 1.0, %v1298
    %v1315 = vsub.f32 1.0, %v1299
    %v1316 = vsub.f32 1.0, %v1300
    %v1317 = vsub.f32 1.0, %v1301
    %v1318 = vsub.f32 1.0, %v1302
    %v1319 = vsub.f32 1.0, %v1303
    %v1320 = vsub.f32 1.0, %v1304
    %v1321 = vsub.f32 1.0, %v1305
    %v1322 = vsub.f32 1.0, %v1306
    %v1323 = vsub.f32 1.0, %v1307
    %v1324 = vsub.f32 1.0, %v1308
    %v1325 = vsub.f32 1.0, %v1309
    %v1326 = vsub.f32 1.0, %v1310
    %v1327 = vsub.f32 1.0, %v1311
    %v1328 = vsub.f32 1.0, %v1312
    %vm1329 = vcmp.ge.f32.partialorder %v785, 0.0
    %vm1330 = vcmp.ge.f32.partialorder %v786, 0.0
    %vm1331 = vcmp.ge.f32.partialorder %v787, 0.0
    %vm1332 = vcmp.ge.f32.partialorder %v788, 0.0
    %vm1333 = vcmp.ge.f32.partialorder %v789, 0.0
    %vm1334 = vcmp.ge.f32.partialorder %v790, 0.0
    %vm1335 = vcmp.ge.f32.partialorder %v791, 0.0
    %vm1336 = vcmp.ge.f32.partialorder %v792, 0.0
    %vm1337 = vcmp.ge.f32.partialorder %v793, 0.0
    %vm1338 = vcmp.ge.f32.partialorder %v794, 0.0
    %vm1339 = vcmp.ge.f32.partialorder %v795, 0.0
    %vm1340 = vcmp.ge.f32.partialorder %v796, 0.0
    %vm1341 = vcmp.ge.f32.partialorder %v797, 0.0
    %vm1342 = vcmp.ge.f32.partialorder %v798, 0.0
    %vm1343 = vcmp.ge.f32.partialorder %v799, 0.0
    %vm1344 = vcmp.ge.f32.partialorder %v800, 0.0
    %v1345 = vsub.f32 0.0, %v1313
    %v1346 = vsub.f32 0.0, %v1314
    %v1347 = vsub.f32 0.0, %v1315
    %v1348 = vsub.f32 0.0, %v1316
    %v1349 = vsub.f32 0.0, %v1317
    %v1350 = vsub.f32 0.0, %v1318
    %v1351 = vsub.f32 0.0, %v1319
    %v1352 = vsub.f32 0.0, %v1320
    %v1353 = vsub.f32 0.0, %v1321
    %v1354 = vsub.f32 0.0, %v1322
    %v1355 = vsub.f32 0.0, %v1323
    %v1356 = vsub.f32 0.0, %v1324
    %v1357 = vsub.f32 0.0, %v1325
    %v1358 = vsub.f32 0.0, %v1326
    %v1359 = vsub.f32 0.0, %v1327
    %v1360 = vsub.f32 0.0, %v1328
    %v1361 = vsel %vm1329, %v1313, %v1345
    %v1362 = vsel %vm1330, %v1314, %v1346
    %v1363 = vsel %vm1331, %v1315, %v1347
    %v1364 = vsel %vm1332, %v1316, %v1348
    %v1365 = vsel %vm1333, %v1317, %v1349
    %v1366 = vsel %vm1334, %v1318, %v1350
    %v1367 = vsel %vm1335, %v1319, %v1351
    %v1368 = vsel %vm1336, %v1320, %v1352
    %v1369 = vsel %vm1337, %v1321, %v1353
    %v1370 = vsel %vm1338, %v1322, %v1354
    %v1371 = vsel %vm1339, %v1323, %v1355
    %v1372 = vsel %vm1340, %v1324, %v1356
    %v1373 = vsel %vm1341, %v1325, %v1357
    %v1374 = vsel %vm1342, %v1326, %v1358
    %v1375 = vsel %vm1343, %v1327, %v1359
    %v1376 = vsel %vm1344, %v1328, %v1360
    %v1377 = vadd.f32 %v1361, 1.0
    %v1378 = vadd.f32 %v1362, 1.0
    %v1379 = vadd.f32 %v1363, 1.0
    %v1380 = vadd.f32 %v1364, 1.0
    %v1381 = vadd.f32 %v1365, 1.0
    %v1382 = vadd.f32 %v1366, 1.0
    %v1383 = vadd.f32 %v1367, 1.0
    %v1384 = vadd.f32 %v1368, 1.0
    %v1385 = vadd.f32 %v1369, 1.0
    %v1386 = vadd.f32 %v1370, 1.0
    %v1387 = vadd.f32 %v1371, 1.0
    %v1388 = vadd.f32 %v1372, 1.0
    %v1389 = vadd.f32 %v1373, 1.0
    %v1390 = vadd.f32 %v1374, 1.0
    %v1391 = vadd.f32 %v1375, 1.0
    %v1392 = vadd.f32 %v1376, 1.0
    %v1393 = vmul.f32 %v769, %v1377
    %v1394 = vmul.f32 %v770, %v1378
    %v1395 = vmul.f32 %v771, %v1379
    %v1396 = vmul.f32 %v772, %v1380
    %v1397 = vmul.f32 %v773, %v1381
    %v1398 = vmul.f32 %v774, %v1382
    %v1399 = vmul.f32 %v775, %v1383
    %v1400 = vmul.f32 %v776, %v1384
    %v1401 = vmul.f32 %v777, %v1385
    %v1402 = vmul.f32 %v778, %v1386
    %v1403 = vmul.f32 %v779, %v1387
    %v1404 = vmul.f32 %v780, %v1388
    %v1405 = vmul.f32 %v781, %v1389
    %v1406 = vmul.f32 %v782, %v1390
    %v1407 = vmul.f32 %v783, %v1391
    %v1408 = vmul.f32 %v784, %v1392
    %v1409 = vpack.c.bf16 %v1394, %v1393
    %v1410 = vpack.c.bf16 %v1396, %v1395
    %v1411 = vpack.c.bf16 %v1398, %v1397
    %v1412 = vpack.c.bf16 %v1400, %v1399
    %v1413 = vpack.c.bf16 %v1402, %v1401
    %v1414 = vpack.c.bf16 %v1404, %v1403
    %v1415 = vpack.c.bf16 %v1406, %v1405
    %v1416 = vpack.c.bf16 %v1408, %v1407
    %v1417 = vld [vmem:[%s9] sm:$0xf]
    %v1418 = vld [vmem:[%s9 + $0x4] sm:$0xf]
    %v1419 = vld [vmem:[%s9 + $0x8] sm:$0xf]
    %v1420 = vld [vmem:[%s9 + $0xc] sm:$0xf]
    %v1421 = vld [vmem:[%s9 + $0x10] sm:$0xf]
    %v1422 = vld [vmem:[%s9 + $0x14] sm:$0xf]
    %v1423 = vld [vmem:[%s9 + $0x18] sm:$0xf]
    %v1424 = vld [vmem:[%s9 + $0x1c] sm:$0xf]
    %v1425 = vld [vmem:[%s10] sm:$0x1]
    %v1427 = vperm.slane %v1425, 0
    %v1437 = vunpack.c.l.b16 %v1417
    %v1438 = vunpack.c.l.b16 %v1418
    %v1439 = vunpack.c.l.b16 %v1419
    %v1440 = vunpack.c.l.b16 %v1420
    %v1441 = vunpack.c.l.b16 %v1421
    %v1442 = vunpack.c.l.b16 %v1422
    %v1443 = vunpack.c.l.b16 %v1423
    %v1444 = vunpack.c.l.b16 %v1424
    %v1445 = vpack.c.b16 %v1438, %v1437
    %v1446 = vpack.c.b16 %v1440, %v1439
    %v1447 = vpack.c.b16 %v1442, %v1441
    %v1448 = vpack.c.b16 %v1444, %v1443
    %vm1453 = vcmask 523264
    %v1455 = vsel %vm1453, %v1409, 0
    %v1458 = vsel %vm1453, %v1410, 0
    %v1461 = vsel %vm1453, %v1411, 0
    %v1464 = vsel %vm1453, %v1412, 0
    %v1467 = vsel %vm1453, %v1413, 0
    %v1470 = vsel %vm1453, %v1414, 0
    %v1473 = vsel %vm1453, %v1415, 0
    %v1476 = vsel %vm1453, %v1416, 0
    %1478 = vmatpush.bf16.msra.mxu0 0
    %1479 = vmatpush.bf16.msra.mxu0 0
    %1480 = vmatpush.bf16.msra.mxu0 0
    %1481 = vmatpush.bf16.msra.mxu0 0
    %1482 = vmatpush.bf16.msra.mxu0 %v1448
    %1483 = vmatpush.bf16.msra.mxu0 %v1447
    %1484 = vmatpush.bf16.msra.mxu0 %v1446
    %1485 = vmatpush.bf16.msra.mxu0 %v1445
    %1486 = vmatmul.bf16.gmra.mxu0 %v1455
    %v1487 = vpop.f32.mrf.mxu0
    %v1488 = vadd.f32 %v1427, %v1487
    %v1489 = vpop.f32.mrf.mxu0
    %v1490 = vadd.f32 %v1427, %v1489
    %1491 = vmatmul.bf16.gmra.mxu0 %v1458
    %v1492 = vpop.f32.mrf.mxu0
    %v1493 = vadd.f32 %v1427, %v1492
    %v1494 = vpop.f32.mrf.mxu0
    %v1495 = vadd.f32 %v1427, %v1494
    %1496 = vmatmul.bf16.gmra.mxu0 %v1461
    %v1497 = vpop.f32.mrf.mxu0
    %v1498 = vadd.f32 %v1427, %v1497
    %v1499 = vpop.f32.mrf.mxu0
    %v1500 = vadd.f32 %v1427, %v1499
    %1501 = vmatmul.bf16.gmra.mxu0 %v1464
    %v1502 = vpop.f32.mrf.mxu0
    %v1503 = vadd.f32 %v1427, %v1502
    %v1504 = vpop.f32.mrf.mxu0
    %v1505 = vadd.f32 %v1427, %v1504
    %1506 = vmatmul.bf16.gmra.mxu0 %v1467
    %v1507 = vpop.f32.mrf.mxu0
    %v1508 = vadd.f32 %v1427, %v1507
    %v1509 = vpop.f32.mrf.mxu0
    %v1510 = vadd.f32 %v1427, %v1509
    %1511 = vmatmul.bf16.gmra.mxu0 %v1470
    %v1512 = vpop.f32.mrf.mxu0
    %v1513 = vadd.f32 %v1427, %v1512
    %v1514 = vpop.f32.mrf.mxu0
    %v1515 = vadd.f32 %v1427, %v1514
    %1516 = vmatmul.bf16.gmra.mxu0 %v1473
    %v1517 = vpop.f32.mrf.mxu0
    %v1518 = vadd.f32 %v1427, %v1517
    %v1519 = vpop.f32.mrf.mxu0
    %v1520 = vadd.f32 %v1427, %v1519
    %1521 = vmatmul.bf16.gmra.mxu0 %v1476
    %v1522 = vpop.f32.mrf.mxu0
    %v1523 = vadd.f32 %v1427, %v1522
    %v1524 = vpop.f32.mrf.mxu0
    %v1525 = vadd.f32 %v1427, %v1524
    %1526 = vdwg.mxu0
    %v1527 = vadd.f32 %v1488, %v652
    %v1528 = vadd.f32 %v1490, %v653
    %v1529 = vadd.f32 %v1493, %v654
    %v1530 = vadd.f32 %v1495, %v655
    %v1531 = vadd.f32 %v1498, %v656
    %v1532 = vadd.f32 %v1500, %v657
    %v1533 = vadd.f32 %v1503, %v658
    %v1534 = vadd.f32 %v1505, %v659
    %v1535 = vadd.f32 %v1508, %v660
    %v1536 = vadd.f32 %v1510, %v661
    %v1537 = vadd.f32 %v1513, %v662
    %v1538 = vadd.f32 %v1515, %v663
    %v1539 = vadd.f32 %v1518, %v664
    %v1540 = vadd.f32 %v1520, %v665
    %v1541 = vadd.f32 %v1523, %v666
    %v1542 = vadd.f32 %v1525, %v667
    %1543 = vst.msk [vmem:[#allocation2] sm:$0xff] %vm340, %v1527
    %1544 = vst.msk [vmem:[#allocation2 + $0x8] sm:$0xff] %vm340, %v1528
    %1545 = vst.msk [vmem:[#allocation2 + $0x10] sm:$0xff] %vm340, %v1529
    %1546 = vst.msk [vmem:[#allocation2 + $0x18] sm:$0xff] %vm340, %v1530
    %1547 = vst.msk [vmem:[#allocation2 + $0x20] sm:$0xff] %vm340, %v1531
    %1548 = vst.msk [vmem:[#allocation2 + $0x28] sm:$0xff] %vm340, %v1532
    %1549 = vst.msk [vmem:[#allocation2 + $0x30] sm:$0xff] %vm340, %v1533
    %1550 = vst.msk [vmem:[#allocation2 + $0x38] sm:$0xff] %vm340, %v1534
    %1551 = vst.msk [vmem:[#allocation2 + $0x40] sm:$0xff] %vm340, %v1535
    %1552 = vst.msk [vmem:[#allocation2 + $0x48] sm:$0xff] %vm340, %v1536
    %1553 = vst.msk [vmem:[#allocation2 + $0x50] sm:$0xff] %vm340, %v1537
    %1554 = vst.msk [vmem:[#allocation2 + $0x58] sm:$0xff] %vm340, %v1538
    %1555 = vst.msk [vmem:[#allocation2 + $0x60] sm:$0xff] %vm340, %v1539
    %1556 = vst.msk [vmem:[#allocation2 + $0x68] sm:$0xff] %vm340, %v1540
    %1557 = vst.msk [vmem:[#allocation2 + $0x70] sm:$0xff] %vm340, %v1541
    %1558 = vst.msk [vmem:[#allocation2 + $0x78] sm:$0xff] %vm340, %v1542
    // Predicated region
    $region46: #{repvit_forward.1} parent=1 // pred_check
      _
    $region47: #{repvit_forward.1} parent=1 // pred_check_branch
      %1560 = sbr.rel (0) target = $region49
    $region48: #{repvit_forward.1} parent=1 // pred_region
      %1562 = vsyncadd [#allocation3], 0
      %s1563 = sshll.u32 [#allocation2], 4
      %s1564 = int_to_ptr.vmem [resolvable:$true] %s1563
      %s1565 = sshll.u32 %s11, 4
      %s1566 = int_to_ptr.hbm [resolvable:$true] %s1565
      %1571 = dma.vmem_to_hbm [thread:$0]  %s1564, 2048, %s1566, [#allocation3], 128, 128, 8
    $region49: #{repvit_forward.1} parent=1 // pred_fallthru
      _
    // Predicated region
    $region50: #{repvit_forward.1} parent=1 // pred_check
      _
    $region51: #{repvit_forward.1} parent=1 // pred_check_branch
      %1573 = sbr.rel (0) target = $region53
    $region52: #{repvit_forward.1} parent=1 // pred_region
      %1575 = dma.done [#allocation3], 2048
    $region53: #{repvit_forward.1} parent=1 // pred_fallthru
      _
    %1576 = vsyncpa [#allocation3], 1

</llo_original>
